<compile_context>
chip_gen: v6e
topology: v6e:2x2x1
jax: 0.10.0
libtpu: 0.0.40
codegen_flags: <defaults>
</compile_context>

<pallas_src>
import functools

import jax
import jax.numpy as jnp
from jax.experimental import pallas as pl
from jax.experimental.pallas import tpu as pltpu


# ----------------------------------------------------------------------------
# In-kernel 'same' Conv1d (kernel 3, padding 1) on flattened [M, Cin] rows.
# ----------------------------------------------------------------------------
def _conv1d_same_k3(x, w_ref, b_ref, seq_len, relu):
    """x: [M, Cin] batch-major frames (row r is frame r % seq_len of sequence
    r // seq_len).  w_ref: [3, Cin, Cout] Ref (tap-major).  b_ref: [1, Cout].

    Three accumulating MXU matmuls over time-shifted copies; shifts built with
    pltpu.roll (XLU) + sequence-boundary masks, so no padded buffer and no
    lane-axis concatenate is materialised.
    """
    m_rows = x.shape[0]
    t = jax.lax.broadcasted_iota(jnp.int32, x.shape, 0) % seq_len
    # x_prev[r] = x[r-1] within the same sequence (zero at frame 0);
    # x_next[r] = x[r+1] within the same sequence (zero at frame T-1).
    x_prev = jnp.where(t == 0, 0.0, pltpu.roll(x, shift=1, axis=0))
    x_next = jnp.where(t == seq_len - 1, 0.0,
                       pltpu.roll(x, shift=m_rows - 1, axis=0))
    y = (jnp.dot(x_prev, w_ref[0], preferred_element_type=jnp.float32)
         + jnp.dot(x, w_ref[1], preferred_element_type=jnp.float32)
         + jnp.dot(x_next, w_ref[2], preferred_element_type=jnp.float32)
         + b_ref[...])
    return jnp.maximum(y, 0.0) if relu else y


# ----------------------------------------------------------------------------
# Fused encoder -> vector-quantizer -> decoder kernel.
# One grid step = one block of whole sequences (M = seqs_per_block * T rows).
# ----------------------------------------------------------------------------
def _vqvae_fused_kernel(x_ref, ew1_ref, eb1_ref, ew2_ref, eb2_ref,
                        embT_ref, emb_ref, esq_ref,
                        dw1_ref, db1_ref, dw2_ref, db2_ref,
                        recon_ref, idx_ref, catq_ref, hist_ref, sse_ref,
                        *, seq_len, rows_per_block, total_rows, mask_tail):
    x = x_ref[...]                                          # [Mblk, Cin]
    n_codes = emb_ref.shape[0]

    # ----------------------------- encoder -----------------------------
    h = _conv1d_same_k3(x, ew1_ref, eb1_ref, seq_len, relu=True)
    z = _conv1d_same_k3(h, ew2_ref, eb2_ref, seq_len, relu=False)   # [Mblk, D]

    # ------------------------- vector quantizer -------------------------
    # argmin_k ||z - e_k||^2 == argmin_k (||e_k||^2 - 2 z.e_k); the per-row
    # ||z||^2 term is constant over k and dropped (perf review).
    ze = jnp.dot(z, embT_ref[...],
                 preferred_element_type=jnp.float32)        # [Mblk, K]
    dist = esq_ref[...] - 2.0 * ze
    min_d = jnp.min(dist, axis=1, keepdims=True)            # [Mblk, 1]
    lane = jax.lax.broadcasted_iota(jnp.int32, dist.shape, 1)
    # first-match tie-break == torch.argmin
    idx = jnp.min(jnp.where(dist <= min_d, lane, n_codes),
                  axis=1, keepdims=True)                    # [Mblk, 1] int32
    onehot = (lane == idx).astype(jnp.float32)              # [Mblk, K]
    q = jnp.dot(onehot, emb_ref[...],
                preferred_element_type=jnp.float32)         # [Mblk, D]

    diff = q - z
    sq = jnp.sum(diff * diff, axis=1, keepdims=True)        # [Mblk, 1]
    if mask_tail:
        # batch padded up to a whole number of blocks: ignore tail rows in the
        # VQ statistics (row validity is a simple global-row bound because
        # rows are batch-major and padding is at the end).
        row = jax.lax.broadcasted_iota(jnp.int32, (x.shape[0], 1), 0)
        valid = ((pl.program_id(0) * rows_per_block + row)
                 < total_rows).astype(jnp.float32)
        onehot_stats = onehot * valid
        sq = sq * valid
    else:
        onehot_stats = onehot

    hist_ref[...] = jnp.sum(onehot_stats, axis=0, keepdims=True)    # [1, K]
    sse_ref[...] = jnp.sum(sq, axis=0, keepdims=True)               # [1, 1]

    idx_ref[...] = idx
    catq_ref[...] = q

    # ----------------------------- decoder -----------------------------
    # straight-through quantized == q in the forward pass; feed q directly.
    h2 = _conv1d_same_k3(q, dw1_ref, db1_ref, seq_len, relu=True)
    recon_ref[...] = _conv1d_same_k3(h2, dw2_ref, db2_ref, seq_len, relu=False)


# ----------------------------------------------------------------------------
# Parameter init (deterministic, PyTorch-like shapes) and full forward.
# ----------------------------------------------------------------------------
def init_params(key, input_dim, hid_dim, enc_dim, K):
    ks = jax.random.split(key, 9)

    def conv_w(k, cin, cout):
        bound = 1.0 / jnp.sqrt(cin * 3.0)
        return jax.random.uniform(k, (3, cin, cout), jnp.float32, -bound, bound)

    def conv_b(k, cin, cout):
        bound = 1.0 / jnp.sqrt(cin * 3.0)
        return jax.random.uniform(k, (cout,), jnp.float32, -bound, bound)

    return dict(
        enc_w1=conv_w(ks[0], input_dim, hid_dim),
        enc_b1=conv_b(ks[1], input_dim, hid_dim),
        enc_w2=conv_w(ks[2], hid_dim, enc_dim),
        enc_b2=conv_b(ks[3], hid_dim, enc_dim),
        dec_w1=conv_w(ks[4], enc_dim, hid_dim),
        dec_b1=conv_b(ks[5], enc_dim, hid_dim),
        dec_w2=conv_w(ks[6], hid_dim, input_dim),
        dec_b2=conv_b(ks[7], hid_dim, input_dim),
        embedding=jax.random.uniform(ks[8], (K, enc_dim), jnp.float32,
                                     -1.0 / K, 1.0 / K),
    )


def audio_vqvae_forward(params, x_nct, commitment_cost=0.25, block_rows=512):
    """x_nct: [B, input_dim, T]  (PyTorch NCW).  Forward pass only."""
    B, Cin, T = x_nct.shape
    emb = params["embedding"].astype(jnp.float32)           # [K, D]
    K, D = emb.shape
    hid = params["enc_b1"].shape[0]
    M = B * T

    # Fold the whole batch into the matmul M dimension.  The grid tiles rows
    # in whole-sequence multiples so the conv halo masks stay (row % T)-based.
    # block_rows caps per-step VMEM (the [Mblk, K] fp32 dist/onehot tiles).
    seqs_per_block = max(1, min(B, max(1, block_rows // T)))
    n_blocks = -(-B // seqs_per_block)
    mblk = seqs_per_block * T
    m_pad = n_blocks * mblk

    x_rows = jnp.transpose(x_nct.astype(jnp.float32), (0, 2, 1)).reshape(M, Cin)
    if m_pad != M:
        x_rows = jnp.pad(x_rows, ((0, m_pad - M), (0, 0)))

    emb_t = emb.T                                            # [D, K]  hoisted
    esq = jnp.sum(emb * emb, axis=1)[None, :]                # [1, K]  hoisted
    eb1 = params["enc_b1"].reshape(1, hid)
    eb2 = params["enc_b2"].reshape(1, D)
    db1 = params["dec_b1"].reshape(1, hid)
    db2 = params["dec_b2"].reshape(1, Cin)

    kern = functools.partial(
        _vqvae_fused_kernel, seq_len=T, rows_per_block=mblk,
        total_rows=M, mask_tail=(m_pad != M))

    c2 = lambda m: (0, 0)
    c3 = lambda m: (0, 0, 0)
    rowmap = lambda m: (m, 0)

    in_specs = [
        pl.BlockSpec((mblk, Cin), rowmap),                   # x rows
        pl.BlockSpec((3, Cin, hid), c3),                     # enc_w1 taps
        pl.BlockSpec((1, hid), c2),                          # enc_b1
        pl.BlockSpec((3, hid, D), c3),                       # enc_w2 taps
        pl.BlockSpec((1, D), c2),                            # enc_b2
        pl.BlockSpec((D, K), c2),                            # codebook^T
        pl.BlockSpec((K, D), c2),                            # codebook
        pl.BlockSpec((1, K), c2),                            # ||e||^2
        pl.BlockSpec((3, D, hid), c3),                       # dec_w1 taps
        pl.BlockSpec((1, hid), c2),                          # dec_b1
        pl.BlockSpec((3, hid, Cin), c3),                     # dec_w2 taps
        pl.BlockSpec((1, Cin), c2),                          # dec_b2
    ]
    out_specs = [
        pl.BlockSpec((mblk, Cin), rowmap),                   # recon rows
        pl.BlockSpec((mblk, 1), rowmap),                     # indices
        pl.BlockSpec((mblk, D), rowmap),                     # quantized rows
        pl.BlockSpec((1, K), rowmap),                        # per-block hist
        pl.BlockSpec((1, 1), rowmap),                        # per-block SSE
    ]
    out_shape = (
        jax.ShapeDtypeStruct((m_pad, Cin), jnp.float32),
        jax.ShapeDtypeStruct((m_pad, 1), jnp.int32),
        jax.ShapeDtypeStruct((m_pad, D), jnp.float32),
        jax.ShapeDtypeStruct((n_blocks, K), jnp.float32),
        jax.ShapeDtypeStruct((n_blocks, 1), jnp.float32),
    )

    recon_rows, idx_rows, catq_rows, hist_blk, sse_blk = pl.pallas_call(
        kern,
        out_shape=out_shape,
        grid=(n_blocks,),
        in_specs=in_specs,
        out_specs=out_specs,
        compiler_params=pltpu.CompilerParams(
            # no cross-step state -> parallel (lets v7x split blocks over TCs)
            dimension_semantics=("parallel",)),
    )(x_rows, params["enc_w1"], eb1, params["enc_w2"], eb2,
      emb_t, emb, esq, params["dec_w1"], db1, params["dec_w2"], db2)

    # Batch-level VQ statistics: tiny wrapper-side reduction over per-block
    # outputs (keeps the kernel grid axis parallel, no scalar outputs).
    sse = jnp.sum(sse_blk)
    hist = jnp.sum(hist_blk, axis=0)                         # [K]
    # detach() only changes gradients; forward values of the two MSEs match.
    e_latent = sse / float(M * D)
    q_latent = e_latent
    vq_loss = q_latent + commitment_cost * e_latent
    avg_p = hist / float(M)
    perplexity = jnp.exp(-jnp.sum(avg_p * jnp.log(avg_p + 1e-10)))

    recon_nct = jnp.transpose(recon_rows[:M].reshape(B, T, Cin), (0, 2, 1))
    encoding_indices = idx_rows[:M]                          # [B*T, 1]
    concatenated_quantized = catq_rows[:M]                   # [B*T, D]

    # TODO(synk): exact contents of the reference VectorQuantizer's `losses`
    # aggregate are repo-specific; returning the three scalar components.
    losses = (e_latent, q_latent, vq_loss)
    return (recon_nct, vq_loss, losses, perplexity, encoding_indices,
            concatenated_quantized)


if __name__ == "__main__":
    B, input_dim, T = 2, 4, 16
    hid_dim, enc_dim, K = 32, 16, 512

    key = jax.random.PRNGKey(0)
    pkey, xkey = jax.random.split(key)
    params = init_params(pkey, input_dim, hid_dim, enc_dim, K)
    x = jax.random.normal(xkey, (B, input_dim, T), jnp.float32)

    fwd = jax.jit(audio_vqvae_forward)
    recon, vq_loss, losses, perplexity, enc_idx, cat_q = fwd(params, x)
    jax.block_until_ready((recon, vq_loss, losses, perplexity, enc_idx, cat_q))

    assert recon.shape == (B, input_dim, T)
    assert enc_idx.shape == (B * T, 1)
    assert cat_q.shape == (B * T, enc_dim)
    assert bool(jnp.isfinite(recon).all())
    assert bool(jnp.isfinite(vq_loss)) and bool(jnp.isfinite(perplexity))
    print("KERNEL_OK")
</pallas_src>

<mosaic_0001>
module attributes {stable_mosaic.version = 11 : i64} {
  func.func @_vqvae_fused_kernel(%arg0: i32, %arg1: memref<32x4xf32, #tpu.memory_space<vmem>>, %arg2: memref<3x4x32xf32, #tpu.memory_space<vmem>>, %arg3: memref<1x32xf32, #tpu.memory_space<vmem>>, %arg4: memref<3x32x16xf32, #tpu.memory_space<vmem>>, %arg5: memref<1x16xf32, #tpu.memory_space<vmem>>, %arg6: memref<16x512xf32, #tpu.memory_space<vmem>>, %arg7: memref<512x16xf32, #tpu.memory_space<vmem>>, %arg8: memref<1x512xf32, #tpu.memory_space<vmem>>, %arg9: memref<3x16x32xf32, #tpu.memory_space<vmem>>, %arg10: memref<1x32xf32, #tpu.memory_space<vmem>>, %arg11: memref<3x32x4xf32, #tpu.memory_space<vmem>>, %arg12: memref<1x4xf32, #tpu.memory_space<vmem>>, %arg13: memref<32x4xf32, #tpu.memory_space<vmem>>, %arg14: memref<32x1xi32, #tpu.memory_space<vmem>>, %arg15: memref<32x16xf32, #tpu.memory_space<vmem>>, %arg16: memref<1x512xf32, #tpu.memory_space<vmem>>, %arg17: memref<1x1xf32, #tpu.memory_space<vmem>>) attributes {dimension_semantics = [#tpu.dimension_semantics<parallel>], iteration_bounds = array<i64: 1>, scalar_prefetch = 0 : i64, scratch_operands = 0 : i64, tpu.core_type = #tpu.core_type<tc>, window_params = [{transform_indices = @transform_0, window_bounds = array<i64: 32, 4>}, {pipeline_mode = #tpu.pipeline_mode<synchronous>, transform_indices = @transform_1, window_bounds = array<i64: 3, 4, 32>}, {pipeline_mode = #tpu.pipeline_mode<synchronous>, transform_indices = @transform_2, window_bounds = array<i64: 1, 32>}, {pipeline_mode = #tpu.pipeline_mode<synchronous>, transform_indices = @transform_3, window_bounds = array<i64: 3, 32, 16>}, {pipeline_mode = #tpu.pipeline_mode<synchronous>, transform_indices = @transform_4, window_bounds = array<i64: 1, 16>}, {pipeline_mode = #tpu.pipeline_mode<synchronous>, transform_indices = @transform_5, window_bounds = array<i64: 16, 512>}, {pipeline_mode = #tpu.pipeline_mode<synchronous>, transform_indices = @transform_6, window_bounds = array<i64: 512, 16>}, {pipeline_mode = #tpu.pipeline_mode<synchronous>, transform_indices = @transform_7, window_bounds = array<i64: 1, 512>}, {pipeline_mode = #tpu.pipeline_mode<synchronous>, transform_indices = @transform_8, window_bounds = array<i64: 3, 16, 32>}, {pipeline_mode = #tpu.pipeline_mode<synchronous>, transform_indices = @transform_9, window_bounds = array<i64: 1, 32>}, {pipeline_mode = #tpu.pipeline_mode<synchronous>, transform_indices = @transform_10, window_bounds = array<i64: 3, 32, 4>}, {pipeline_mode = #tpu.pipeline_mode<synchronous>, transform_indices = @transform_11, window_bounds = array<i64: 1, 4>}, {transform_indices = @transform_12, window_bounds = array<i64: 32, 4>}, {transform_indices = @transform_13, window_bounds = array<i64: 32, 1>}, {transform_indices = @transform_14, window_bounds = array<i64: 32, 16>}, {transform_indices = @transform_15, window_bounds = array<i64: 1, 512>}, {transform_indices = @transform_16, window_bounds = array<i64: 1, 1>}]} {
    %c0 = arith.constant 0 : index
    %c0_0 = arith.constant 0 : index
    %0 = vector.load %arg1[%c0, %c0_0] : memref<32x4xf32, #tpu.memory_space<vmem>>, vector<32x4xf32>
    %1 = tpu.iota {dimensions = array<i32: 0>} : vector<32x4xi32>
    %c16_i32 = arith.constant 16 : i32
    %c0_i32 = arith.constant 0 : i32
    %2 = arith.cmpi eq, %c16_i32, %c0_i32 : i32
    %c1_i32 = arith.constant 1 : i32
    %3 = arith.select %2, %c1_i32, %c16_i32 : i32
    %4 = vector.broadcast %3 : i32 to vector<32x4xi32>
    %5 = arith.remsi %1, %4 : vector<32x4xi32>
    %c0_i32_1 = arith.constant 0 : i32
    %6 = vector.broadcast %c0_i32_1 : i32 to vector<32x4xi32>
    %7 = arith.cmpi ne, %5, %6 : vector<32x4xi32>
    %c0_i32_2 = arith.constant 0 : i32
    %8 = vector.broadcast %c0_i32_2 : i32 to vector<32x4xi32>
    %9 = arith.cmpi slt, %5, %8 : vector<32x4xi32>
    %c0_i32_3 = arith.constant 0 : i32
    %10 = arith.cmpi slt, %3, %c0_i32_3 : i32
    %11 = vector.broadcast %10 : i1 to vector<32x4xi1>
    %12 = vector.broadcast %11 : vector<32x4xi1> to vector<32x4xi1>
    %13 = arith.xori %9, %12 : vector<32x4xi1>
    %14 = arith.andi %13, %7 : vector<32x4xi1>
    %15 = vector.broadcast %3 : i32 to vector<32x4xi32>
    %16 = arith.addi %5, %15 : vector<32x4xi32>
    %17 = arith.select %14, %16, %5 : vector<32x4xi1>, vector<32x4xi32>
    %c0_i32_4 = arith.constant 0 : i32
    %18 = vector.broadcast %c0_i32_4 : i32 to vector<32x4xi32>
    %19 = arith.cmpi eq, %17, %18 : vector<32x4xi32>
    %c1_i32_5 = arith.constant 1 : i32
    %20 = tpu.dynamic_rotate %0 by %c1_i32_5 dim 0 : vector<32x4xf32>, i32 -> vector<32x4xf32>
    %cst = arith.constant 0.000000e+00 : f32
    %21 = vector.broadcast %cst : f32 to vector<32x4xf32>
    %22 = arith.select %19, %21, %20 : vector<32x4xi1>, vector<32x4xf32>
    %c15_i32 = arith.constant 15 : i32
    %23 = vector.broadcast %c15_i32 : i32 to vector<32x4xi32>
    %24 = arith.cmpi eq, %17, %23 : vector<32x4xi32>
    %c31_i32 = arith.constant 31 : i32
    %25 = tpu.dynamic_rotate %0 by %c31_i32 dim 0 : vector<32x4xf32>, i32 -> vector<32x4xf32>
    %cst_6 = arith.constant 0.000000e+00 : f32
    %26 = vector.broadcast %cst_6 : f32 to vector<32x4xf32>
    %27 = arith.select %24, %26, %25 : vector<32x4xi1>, vector<32x4xf32>
    %c0_7 = arith.constant 0 : index
    %c0_8 = arith.constant 0 : index
    %c0_9 = arith.constant 0 : index
    %28 = vector.load %arg2[%c0_7, %c0_8, %c0_9] : memref<3x4x32xf32, #tpu.memory_space<vmem>>, vector<1x4x32xf32>
    %29 = vector.shape_cast %28 : vector<1x4x32xf32> to vector<4x32xf32>
    %cst_10 = arith.constant dense<0.000000e+00> : vector<32x32xf32>
    %30 = tpu.matmul %22, %29, %cst_10 {dimension_numbers = #tpu.dot_dimension_numbers<[1], [0], [0], [1], [0, 0, 1, 1], [], []>} : vector<32x4xf32>, vector<4x32xf32>, vector<32x32xf32> -> vector<32x32xf32>
    %c1 = arith.constant 1 : index
    %c0_11 = arith.constant 0 : index
    %c0_12 = arith.constant 0 : index
    %31 = vector.load %arg2[%c1, %c0_11, %c0_12] : memref<3x4x32xf32, #tpu.memory_space<vmem>>, vector<1x4x32xf32>
    %32 = vector.shape_cast %31 : vector<1x4x32xf32> to vector<4x32xf32>
    %cst_13 = arith.constant dense<0.000000e+00> : vector<32x32xf32>
    %33 = tpu.matmul %0, %32, %cst_13 {dimension_numbers = #tpu.dot_dimension_numbers<[1], [0], [0], [1], [0, 0, 1, 1], [], []>} : vector<32x4xf32>, vector<4x32xf32>, vector<32x32xf32> -> vector<32x32xf32>
    %34 = arith.addf %30, %33 : vector<32x32xf32>
    %c2 = arith.constant 2 : index
    %c0_14 = arith.constant 0 : index
    %c0_15 = arith.constant 0 : index
    %35 = vector.load %arg2[%c2, %c0_14, %c0_15] : memref<3x4x32xf32, #tpu.memory_space<vmem>>, vector<1x4x32xf32>
    %36 = vector.shape_cast %35 : vector<1x4x32xf32> to vector<4x32xf32>
    %cst_16 = arith.constant dense<0.000000e+00> : vector<32x32xf32>
    %37 = tpu.matmul %27, %36, %cst_16 {dimension_numbers = #tpu.dot_dimension_numbers<[1], [0], [0], [1], [0, 0, 1, 1], [], []>} : vector<32x4xf32>, vector<4x32xf32>, vector<32x32xf32> -> vector<32x32xf32>
    %38 = arith.addf %34, %37 : vector<32x32xf32>
    %c0_17 = arith.constant 0 : index
    %c0_18 = arith.constant 0 : index
    %39 = vector.load %arg3[%c0_17, %c0_18] : memref<1x32xf32, #tpu.memory_space<vmem>>, vector<1x32xf32>
    %40 = vector.broadcast %39 : vector<1x32xf32> to vector<32x32xf32>
    %41 = arith.addf %38, %40 : vector<32x32xf32>
    %cst_19 = arith.constant 0.000000e+00 : f32
    %42 = vector.broadcast %cst_19 : f32 to vector<32x32xf32>
    %43 = arith.maximumf %41, %42 : vector<32x32xf32>
    %44 = tpu.iota {dimensions = array<i32: 0>} : vector<32x32xi32>
    %c16_i32_20 = arith.constant 16 : i32
    %c0_i32_21 = arith.constant 0 : i32
    %45 = arith.cmpi eq, %c16_i32_20, %c0_i32_21 : i32
    %c1_i32_22 = arith.constant 1 : i32
    %46 = arith.select %45, %c1_i32_22, %c16_i32_20 : i32
    %47 = vector.broadcast %46 : i32 to vector<32x32xi32>
    %48 = arith.remsi %44, %47 : vector<32x32xi32>
    %c0_i32_23 = arith.constant 0 : i32
    %49 = vector.broadcast %c0_i32_23 : i32 to vector<32x32xi32>
    %50 = arith.cmpi ne, %48, %49 : vector<32x32xi32>
    %c0_i32_24 = arith.constant 0 : i32
    %51 = vector.broadcast %c0_i32_24 : i32 to vector<32x32xi32>
    %52 = arith.cmpi slt, %48, %51 : vector<32x32xi32>
    %c0_i32_25 = arith.constant 0 : i32
    %53 = arith.cmpi slt, %46, %c0_i32_25 : i32
    %54 = vector.broadcast %53 : i1 to vector<32x32xi1>
    %55 = vector.broadcast %54 : vector<32x32xi1> to vector<32x32xi1>
    %56 = arith.xori %52, %55 : vector<32x32xi1>
    %57 = arith.andi %56, %50 : vector<32x32xi1>
    %58 = vector.broadcast %46 : i32 to vector<32x32xi32>
    %59 = arith.addi %48, %58 : vector<32x32xi32>
    %60 = arith.select %57, %59, %48 : vector<32x32xi1>, vector<32x32xi32>
    %c0_i32_26 = arith.constant 0 : i32
    %61 = vector.broadcast %c0_i32_26 : i32 to vector<32x32xi32>
    %62 = arith.cmpi eq, %60, %61 : vector<32x32xi32>
    %c1_i32_27 = arith.constant 1 : i32
    %63 = tpu.dynamic_rotate %43 by %c1_i32_27 dim 0 : vector<32x32xf32>, i32 -> vector<32x32xf32>
    %cst_28 = arith.constant 0.000000e+00 : f32
    %64 = vector.broadcast %cst_28 : f32 to vector<32x32xf32>
    %65 = arith.select %62, %64, %63 : vector<32x32xi1>, vector<32x32xf32>
    %c15_i32_29 = arith.constant 15 : i32
    %66 = vector.broadcast %c15_i32_29 : i32 to vector<32x32xi32>
    %67 = arith.cmpi eq, %60, %66 : vector<32x32xi32>
    %c31_i32_30 = arith.constant 31 : i32
    %68 = tpu.dynamic_rotate %43 by %c31_i32_30 dim 0 : vector<32x32xf32>, i32 -> vector<32x32xf32>
    %cst_31 = arith.constant 0.000000e+00 : f32
    %69 = vector.broadcast %cst_31 : f32 to vector<32x32xf32>
    %70 = arith.select %67, %69, %68 : vector<32x32xi1>, vector<32x32xf32>
    %c0_32 = arith.constant 0 : index
    %c0_33 = arith.constant 0 : index
    %c0_34 = arith.constant 0 : index
    %71 = vector.load %arg4[%c0_32, %c0_33, %c0_34] : memref<3x32x16xf32, #tpu.memory_space<vmem>>, vector<1x32x16xf32>
    %72 = vector.shape_cast %71 : vector<1x32x16xf32> to vector<32x16xf32>
    %cst_35 = arith.constant dense<0.000000e+00> : vector<32x16xf32>
    %73 = tpu.matmul %65, %72, %cst_35 {dimension_numbers = #tpu.dot_dimension_numbers<[1], [0], [0], [1], [0, 0, 1, 1], [], []>} : vector<32x32xf32>, vector<32x16xf32>, vector<32x16xf32> -> vector<32x16xf32>
    %c1_36 = arith.constant 1 : index
    %c0_37 = arith.constant 0 : index
    %c0_38 = arith.constant 0 : index
    %74 = vector.load %arg4[%c1_36, %c0_37, %c0_38] : memref<3x32x16xf32, #tpu.memory_space<vmem>>, vector<1x32x16xf32>
    %75 = vector.shape_cast %74 : vector<1x32x16xf32> to vector<32x16xf32>
    %cst_39 = arith.constant dense<0.000000e+00> : vector<32x16xf32>
    %76 = tpu.matmul %43, %75, %cst_39 {dimension_numbers = #tpu.dot_dimension_numbers<[1], [0], [0], [1], [0, 0, 1, 1], [], []>} : vector<32x32xf32>, vector<32x16xf32>, vector<32x16xf32> -> vector<32x16xf32>
    %77 = arith.addf %73, %76 : vector<32x16xf32>
    %c2_40 = arith.constant 2 : index
    %c0_41 = arith.constant 0 : index
    %c0_42 = arith.constant 0 : index
    %78 = vector.load %arg4[%c2_40, %c0_41, %c0_42] : memref<3x32x16xf32, #tpu.memory_space<vmem>>, vector<1x32x16xf32>
    %79 = vector.shape_cast %78 : vector<1x32x16xf32> to vector<32x16xf32>
    %cst_43 = arith.constant dense<0.000000e+00> : vector<32x16xf32>
    %80 = tpu.matmul %70, %79, %cst_43 {dimension_numbers = #tpu.dot_dimension_numbers<[1], [0], [0], [1], [0, 0, 1, 1], [], []>} : vector<32x32xf32>, vector<32x16xf32>, vector<32x16xf32> -> vector<32x16xf32>
    %81 = arith.addf %77, %80 : vector<32x16xf32>
    %c0_44 = arith.constant 0 : index
    %c0_45 = arith.constant 0 : index
    %82 = vector.load %arg5[%c0_44, %c0_45] : memref<1x16xf32, #tpu.memory_space<vmem>>, vector<1x16xf32>
    %83 = vector.broadcast %82 : vector<1x16xf32> to vector<32x16xf32>
    %84 = arith.addf %81, %83 : vector<32x16xf32>
    %c0_46 = arith.constant 0 : index
    %c0_47 = arith.constant 0 : index
    %85 = vector.load %arg6[%c0_46, %c0_47] : memref<16x512xf32, #tpu.memory_space<vmem>>, vector<16x512xf32>
    %cst_48 = arith.constant dense<0.000000e+00> : vector<32x512xf32>
    %86 = tpu.matmul %84, %85, %cst_48 {dimension_numbers = #tpu.dot_dimension_numbers<[1], [0], [0], [1], [0, 0, 1, 1], [], []>} : vector<32x16xf32>, vector<16x512xf32>, vector<32x512xf32> -> vector<32x512xf32>
    %c0_49 = arith.constant 0 : index
    %c0_50 = arith.constant 0 : index
    %87 = vector.load %arg8[%c0_49, %c0_50] : memref<1x512xf32, #tpu.memory_space<vmem>>, vector<1x512xf32>
    %cst_51 = arith.constant 2.000000e+00 : f32
    %88 = vector.broadcast %cst_51 : f32 to vector<32x512xf32>
    %89 = arith.mulf %88, %86 : vector<32x512xf32>
    %90 = vector.broadcast %87 : vector<1x512xf32> to vector<32x512xf32>
    %91 = arith.subf %90, %89 : vector<32x512xf32>
    %cst_52 = arith.constant dense<0x7F800000> : vector<32xf32>
    %92 = vector.multi_reduction <minimumf>, %91, %cst_52 [1] : vector<32x512xf32> to vector<32xf32>
    %93 = vector.shape_cast %92 : vector<32xf32> to vector<32x1xf32>
    %94 = tpu.iota {dimensions = array<i32: 1>} : vector<32x512xi32>
    %95 = vector.broadcast %93 : vector<32x1xf32> to vector<32x512xf32>
    %96 = arith.cmpf ole, %91, %95 : vector<32x512xf32>
    %c512_i32 = arith.constant 512 : i32
    %97 = vector.broadcast %c512_i32 : i32 to vector<32x512xi32>
    %98 = arith.select %96, %94, %97 : vector<32x512xi1>, vector<32x512xi32>
    %cst_53 = arith.constant dense<2147483647> : vector<32xi32>
    %99 = vector.multi_reduction <minsi>, %98, %cst_53 [1] : vector<32x512xi32> to vector<32xi32>
    %100 = vector.shape_cast %99 : vector<32xi32> to vector<32x1xi32>
    %101 = vector.broadcast %100 : vector<32x1xi32> to vector<32x512xi32>
    %102 = arith.cmpi eq, %94, %101 : vector<32x512xi32>
    %103 = arith.extui %102 : vector<32x512xi1> to vector<32x512xi32>
    %104 = arith.sitofp %103 : vector<32x512xi32> to vector<32x512xf32>
    %c0_54 = arith.constant 0 : index
    %c0_55 = arith.constant 0 : index
    %105 = vector.load %arg7[%c0_54, %c0_55] : memref<512x16xf32, #tpu.memory_space<vmem>>, vector<512x16xf32>
    %cst_56 = arith.constant dense<0.000000e+00> : vector<32x16xf32>
    %106 = tpu.matmul %104, %105, %cst_56 {dimension_numbers = #tpu.dot_dimension_numbers<[1], [0], [0], [1], [0, 0, 1, 1], [], []>} : vector<32x512xf32>, vector<512x16xf32>, vector<32x16xf32> -> vector<32x16xf32>
    %107 = arith.subf %106, %84 : vector<32x16xf32>
    %108 = arith.mulf %107, %107 : vector<32x16xf32>
    %cst_57 = arith.constant dense<0.000000e+00> : vector<32xf32>
    %109 = vector.multi_reduction <add>, %108, %cst_57 [1] : vector<32x16xf32> to vector<32xf32>
    %110 = vector.shape_cast %109 : vector<32xf32> to vector<32x1xf32>
    %cst_58 = arith.constant dense<0.000000e+00> : vector<512xf32>
    %111 = vector.multi_reduction <add>, %104, %cst_58 [0] : vector<32x512xf32> to vector<512xf32>
    %112 = vector.shape_cast %111 : vector<512xf32> to vector<1x512xf32>
    %c0_59 = arith.constant 0 : index
    %c0_60 = arith.constant 0 : index
    %113 = vector.load %arg16[%c0_59, %c0_60] : memref<1x512xf32, #tpu.memory_space<vmem>>, vector<1x512xf32>
    tpu.vector_store %arg16[%c0_59, %c0_60], %112 {strides = array<i32>} : memref<1x512xf32, #tpu.memory_space<vmem>>, vector<1x512xf32>,
    %cst_61 = arith.constant dense<0.000000e+00> : vector<1xf32>
    %114 = vector.multi_reduction <add>, %110, %cst_61 [0] : vector<32x1xf32> to vector<1xf32>
    %115 = vector.shape_cast %114 : vector<1xf32> to vector<1x1xf32>
    %c0_62 = arith.constant 0 : index
    %c0_63 = arith.constant 0 : index
    %116 = vector.load %arg17[%c0_62, %c0_63] : memref<1x1xf32, #tpu.memory_space<vmem>>, vector<1x1xf32>
    tpu.vector_store %arg17[%c0_62, %c0_63], %115 {strides = array<i32>} : memref<1x1xf32, #tpu.memory_space<vmem>>, vector<1x1xf32>,
    %c0_64 = arith.constant 0 : index
    %c0_65 = arith.constant 0 : index
    %117 = vector.load %arg14[%c0_64, %c0_65] : memref<32x1xi32, #tpu.memory_space<vmem>>, vector<32x1xi32>
    tpu.vector_store %arg14[%c0_64, %c0_65], %100 {strides = array<i32>} : memref<32x1xi32, #tpu.memory_space<vmem>>, vector<32x1xi32>,
    %c0_66 = arith.constant 0 : index
    %c0_67 = arith.constant 0 : index
    %118 = vector.load %arg15[%c0_66, %c0_67] : memref<32x16xf32, #tpu.memory_space<vmem>>, vector<32x16xf32>
    tpu.vector_store %arg15[%c0_66, %c0_67], %106 {strides = array<i32>} : memref<32x16xf32, #tpu.memory_space<vmem>>, vector<32x16xf32>,
    %119 = tpu.iota {dimensions = array<i32: 0>} : vector<32x16xi32>
    %c16_i32_68 = arith.constant 16 : i32
    %c0_i32_69 = arith.constant 0 : i32
    %120 = arith.cmpi eq, %c16_i32_68, %c0_i32_69 : i32
    %c1_i32_70 = arith.constant 1 : i32
    %121 = arith.select %120, %c1_i32_70, %c16_i32_68 : i32
    %122 = vector.broadcast %121 : i32 to vector<32x16xi32>
    %123 = arith.remsi %119, %122 : vector<32x16xi32>
    %c0_i32_71 = arith.constant 0 : i32
    %124 = vector.broadcast %c0_i32_71 : i32 to vector<32x16xi32>
    %125 = arith.cmpi ne, %123, %124 : vector<32x16xi32>
    %c0_i32_72 = arith.constant 0 : i32
    %126 = vector.broadcast %c0_i32_72 : i32 to vector<32x16xi32>
    %127 = arith.cmpi slt, %123, %126 : vector<32x16xi32>
    %c0_i32_73 = arith.constant 0 : i32
    %128 = arith.cmpi slt, %121, %c0_i32_73 : i32
    %129 = vector.broadcast %128 : i1 to vector<32x16xi1>
    %130 = vector.broadcast %129 : vector<32x16xi1> to vector<32x16xi1>
    %131 = arith.xori %127, %130 : vector<32x16xi1>
    %132 = arith.andi %131, %125 : vector<32x16xi1>
    %133 = vector.broadcast %121 : i32 to vector<32x16xi32>
    %134 = arith.addi %123, %133 : vector<32x16xi32>
    %135 = arith.select %132, %134, %123 : vector<32x16xi1>, vector<32x16xi32>
    %c0_i32_74 = arith.constant 0 : i32
    %136 = vector.broadcast %c0_i32_74 : i32 to vector<32x16xi32>
    %137 = arith.cmpi eq, %135, %136 : vector<32x16xi32>
    %c1_i32_75 = arith.constant 1 : i32
    %138 = tpu.dynamic_rotate %106 by %c1_i32_75 dim 0 : vector<32x16xf32>, i32 -> vector<32x16xf32>
    %cst_76 = arith.constant 0.000000e+00 : f32
    %139 = vector.broadcast %cst_76 : f32 to vector<32x16xf32>
    %140 = arith.select %137, %139, %138 : vector<32x16xi1>, vector<32x16xf32>
    %c15_i32_77 = arith.constant 15 : i32
    %141 = vector.broadcast %c15_i32_77 : i32 to vector<32x16xi32>
    %142 = arith.cmpi eq, %135, %141 : vector<32x16xi32>
    %c31_i32_78 = arith.constant 31 : i32
    %143 = tpu.dynamic_rotate %106 by %c31_i32_78 dim 0 : vector<32x16xf32>, i32 -> vector<32x16xf32>
    %cst_79 = arith.constant 0.000000e+00 : f32
    %144 = vector.broadcast %cst_79 : f32 to vector<32x16xf32>
    %145 = arith.select %142, %144, %143 : vector<32x16xi1>, vector<32x16xf32>
    %c0_80 = arith.constant 0 : index
    %c0_81 = arith.constant 0 : index
    %c0_82 = arith.constant 0 : index
    %146 = vector.load %arg9[%c0_80, %c0_81, %c0_82] : memref<3x16x32xf32, #tpu.memory_space<vmem>>, vector<1x16x32xf32>
    %147 = vector.shape_cast %146 : vector<1x16x32xf32> to vector<16x32xf32>
    %cst_83 = arith.constant dense<0.000000e+00> : vector<32x32xf32>
    %148 = tpu.matmul %140, %147, %cst_83 {dimension_numbers = #tpu.dot_dimension_numbers<[1], [0], [0], [1], [0, 0, 1, 1], [], []>} : vector<32x16xf32>, vector<16x32xf32>, vector<32x32xf32> -> vector<32x32xf32>
    %c1_84 = arith.constant 1 : index
    %c0_85 = arith.constant 0 : index
    %c0_86 = arith.constant 0 : index
    %149 = vector.load %arg9[%c1_84, %c0_85, %c0_86] : memref<3x16x32xf32, #tpu.memory_space<vmem>>, vector<1x16x32xf32>
    %150 = vector.shape_cast %149 : vector<1x16x32xf32> to vector<16x32xf32>
    %cst_87 = arith.constant dense<0.000000e+00> : vector<32x32xf32>
    %151 = tpu.matmul %106, %150, %cst_87 {dimension_numbers = #tpu.dot_dimension_numbers<[1], [0], [0], [1], [0, 0, 1, 1], [], []>} : vector<32x16xf32>, vector<16x32xf32>, vector<32x32xf32> -> vector<32x32xf32>
    %152 = arith.addf %148, %151 : vector<32x32xf32>
    %c2_88 = arith.constant 2 : index
    %c0_89 = arith.constant 0 : index
    %c0_90 = arith.constant 0 : index
    %153 = vector.load %arg9[%c2_88, %c0_89, %c0_90] : memref<3x16x32xf32, #tpu.memory_space<vmem>>, vector<1x16x32xf32>
    %154 = vector.shape_cast %153 : vector<1x16x32xf32> to vector<16x32xf32>
    %cst_91 = arith.constant dense<0.000000e+00> : vector<32x32xf32>
    %155 = tpu.matmul %145, %154, %cst_91 {dimension_numbers = #tpu.dot_dimension_numbers<[1], [0], [0], [1], [0, 0, 1, 1], [], []>} : vector<32x16xf32>, vector<16x32xf32>, vector<32x32xf32> -> vector<32x32xf32>
    %156 = arith.addf %152, %155 : vector<32x32xf32>
    %c0_92 = arith.constant 0 : index
    %c0_93 = arith.constant 0 : index
    %157 = vector.load %arg10[%c0_92, %c0_93] : memref<1x32xf32, #tpu.memory_space<vmem>>, vector<1x32xf32>
    %158 = vector.broadcast %157 : vector<1x32xf32> to vector<32x32xf32>
    %159 = arith.addf %156, %158 : vector<32x32xf32>
    %cst_94 = arith.constant 0.000000e+00 : f32
    %160 = vector.broadcast %cst_94 : f32 to vector<32x32xf32>
    %161 = arith.maximumf %159, %160 : vector<32x32xf32>
    %162 = tpu.iota {dimensions = array<i32: 0>} : vector<32x32xi32>
    %c16_i32_95 = arith.constant 16 : i32
    %c0_i32_96 = arith.constant 0 : i32
    %163 = arith.cmpi eq, %c16_i32_95, %c0_i32_96 : i32
    %c1_i32_97 = arith.constant 1 : i32
    %164 = arith.select %163, %c1_i32_97, %c16_i32_95 : i32
    %165 = vector.broadcast %164 : i32 to vector<32x32xi32>
    %166 = arith.remsi %162, %165 : vector<32x32xi32>
    %c0_i32_98 = arith.constant 0 : i32
    %167 = vector.broadcast %c0_i32_98 : i32 to vector<32x32xi32>
    %168 = arith.cmpi ne, %166, %167 : vector<32x32xi32>
    %c0_i32_99 = arith.constant 0 : i32
    %169 = vector.broadcast %c0_i32_99 : i32 to vector<32x32xi32>
    %170 = arith.cmpi slt, %166, %169 : vector<32x32xi32>
    %c0_i32_100 = arith.constant 0 : i32
    %171 = arith.cmpi slt, %164, %c0_i32_100 : i32
    %172 = vector.broadcast %171 : i1 to vector<32x32xi1>
    %173 = vector.broadcast %172 : vector<32x32xi1> to vector<32x32xi1>
    %174 = arith.xori %170, %173 : vector<32x32xi1>
    %175 = arith.andi %174, %168 : vector<32x32xi1>
    %176 = vector.broadcast %164 : i32 to vector<32x32xi32>
    %177 = arith.addi %166, %176 : vector<32x32xi32>
    %178 = arith.select %175, %177, %166 : vector<32x32xi1>, vector<32x32xi32>
    %c0_i32_101 = arith.constant 0 : i32
    %179 = vector.broadcast %c0_i32_101 : i32 to vector<32x32xi32>
    %180 = arith.cmpi eq, %178, %179 : vector<32x32xi32>
    %c1_i32_102 = arith.constant 1 : i32
    %181 = tpu.dynamic_rotate %161 by %c1_i32_102 dim 0 : vector<32x32xf32>, i32 -> vector<32x32xf32>
    %cst_103 = arith.constant 0.000000e+00 : f32
    %182 = vector.broadcast %cst_103 : f32 to vector<32x32xf32>
    %183 = arith.select %180, %182, %181 : vector<32x32xi1>, vector<32x32xf32>
    %c15_i32_104 = arith.constant 15 : i32
    %184 = vector.broadcast %c15_i32_104 : i32 to vector<32x32xi32>
    %185 = arith.cmpi eq, %178, %184 : vector<32x32xi32>
    %c31_i32_105 = arith.constant 31 : i32
    %186 = tpu.dynamic_rotate %161 by %c31_i32_105 dim 0 : vector<32x32xf32>, i32 -> vector<32x32xf32>
    %cst_106 = arith.constant 0.000000e+00 : f32
    %187 = vector.broadcast %cst_106 : f32 to vector<32x32xf32>
    %188 = arith.select %185, %187, %186 : vector<32x32xi1>, vector<32x32xf32>
    %c0_107 = arith.constant 0 : index
    %c0_108 = arith.constant 0 : index
    %c0_109 = arith.constant 0 : index
    %189 = vector.load %arg11[%c0_107, %c0_108, %c0_109] : memref<3x32x4xf32, #tpu.memory_space<vmem>>, vector<1x32x4xf32>
    %190 = vector.shape_cast %189 : vector<1x32x4xf32> to vector<32x4xf32>
    %cst_110 = arith.constant dense<0.000000e+00> : vector<32x4xf32>
    %191 = tpu.matmul %183, %190, %cst_110 {dimension_numbers = #tpu.dot_dimension_numbers<[1], [0], [0], [1], [0, 0, 1, 1], [], []>} : vector<32x32xf32>, vector<32x4xf32>, vector<32x4xf32> -> vector<32x4xf32>
    %c1_111 = arith.constant 1 : index
    %c0_112 = arith.constant 0 : index
    %c0_113 = arith.constant 0 : index
    %192 = vector.load %arg11[%c1_111, %c0_112, %c0_113] : memref<3x32x4xf32, #tpu.memory_space<vmem>>, vector<1x32x4xf32>
    %193 = vector.shape_cast %192 : vector<1x32x4xf32> to vector<32x4xf32>
    %cst_114 = arith.constant dense<0.000000e+00> : vector<32x4xf32>
    %194 = tpu.matmul %161, %193, %cst_114 {dimension_numbers = #tpu.dot_dimension_numbers<[1], [0], [0], [1], [0, 0, 1, 1], [], []>} : vector<32x32xf32>, vector<32x4xf32>, vector<32x4xf32> -> vector<32x4xf32>
    %195 = arith.addf %191, %194 : vector<32x4xf32>
    %c2_115 = arith.constant 2 : index
    %c0_116 = arith.constant 0 : index
    %c0_117 = arith.constant 0 : index
    %196 = vector.load %arg11[%c2_115, %c0_116, %c0_117] : memref<3x32x4xf32, #tpu.memory_space<vmem>>, vector<1x32x4xf32>
    %197 = vector.shape_cast %196 : vector<1x32x4xf32> to vector<32x4xf32>
    %cst_118 = arith.constant dense<0.000000e+00> : vector<32x4xf32>
    %198 = tpu.matmul %188, %197, %cst_118 {dimension_numbers = #tpu.dot_dimension_numbers<[1], [0], [0], [1], [0, 0, 1, 1], [], []>} : vector<32x32xf32>, vector<32x4xf32>, vector<32x4xf32> -> vector<32x4xf32>
    %199 = arith.addf %195, %198 : vector<32x4xf32>
    %c0_119 = arith.constant 0 : index
    %c0_120 = arith.constant 0 : index
    %200 = vector.load %arg12[%c0_119, %c0_120] : memref<1x4xf32, #tpu.memory_space<vmem>>, vector<1x4xf32>
    %201 = vector.broadcast %200 : vector<1x4xf32> to vector<32x4xf32>
    %202 = arith.addf %199, %201 : vector<32x4xf32>
    %c0_121 = arith.constant 0 : index
    %c0_122 = arith.constant 0 : index
    %203 = vector.load %arg13[%c0_121, %c0_122] : memref<32x4xf32, #tpu.memory_space<vmem>>, vector<32x4xf32>
    tpu.vector_store %arg13[%c0_121, %c0_122], %202 {strides = array<i32>} : memref<32x4xf32, #tpu.memory_space<vmem>>, vector<32x4xf32>,
    return
  }
  func.func @transform_0(%arg0: i32) -> (i32, i32) {
    %c0_i32 = arith.constant 0 : i32
    %c0_i32_0 = arith.constant 0 : i32
    return %arg0, %c0_i32 : i32, i32
  }
  func.func @transform_1(%arg0: i32) -> (i32, i32, i32) {
    %c0_i32 = arith.constant 0 : i32
    %c0_i32_0 = arith.constant 0 : i32
    %c0_i32_1 = arith.constant 0 : i32
    %c0_i32_2 = arith.constant 0 : i32
    return %c0_i32, %c0_i32_0, %c0_i32_1 : i32, i32, i32
  }
  func.func @transform_2(%arg0: i32) -> (i32, i32) {
    %c0_i32 = arith.constant 0 : i32
    %c0_i32_0 = arith.constant 0 : i32
    %c0_i32_1 = arith.constant 0 : i32
    return %c0_i32, %c0_i32_0 : i32, i32
  }
  func.func @transform_3(%arg0: i32) -> (i32, i32, i32) {
    %c0_i32 = arith.constant 0 : i32
    %c0_i32_0 = arith.constant 0 : i32
    %c0_i32_1 = arith.constant 0 : i32
    %c0_i32_2 = arith.constant 0 : i32
    return %c0_i32, %c0_i32_0, %c0_i32_1 : i32, i32, i32
  }
  func.func @transform_4(%arg0: i32) -> (i32, i32) {
    %c0_i32 = arith.constant 0 : i32
    %c0_i32_0 = arith.constant 0 : i32
    %c0_i32_1 = arith.constant 0 : i32
    return %c0_i32, %c0_i32_0 : i32, i32
  }
  func.func @transform_5(%arg0: i32) -> (i32, i32) {
    %c0_i32 = arith.constant 0 : i32
    %c0_i32_0 = arith.constant 0 : i32
    %c0_i32_1 = arith.constant 0 : i32
    return %c0_i32, %c0_i32_0 : i32, i32
  }
  func.func @transform_6(%arg0: i32) -> (i32, i32) {
    %c0_i32 = arith.constant 0 : i32
    %c0_i32_0 = arith.constant 0 : i32
    %c0_i32_1 = arith.constant 0 : i32
    return %c0_i32, %c0_i32_0 : i32, i32
  }
  func.func @transform_7(%arg0: i32) -> (i32, i32) {
    %c0_i32 = arith.constant 0 : i32
    %c0_i32_0 = arith.constant 0 : i32
    %c0_i32_1 = arith.constant 0 : i32
    return %c0_i32, %c0_i32_0 : i32, i32
  }
  func.func @transform_8(%arg0: i32) -> (i32, i32, i32) {
    %c0_i32 = arith.constant 0 : i32
    %c0_i32_0 = arith.constant 0 : i32
    %c0_i32_1 = arith.constant 0 : i32
    %c0_i32_2 = arith.constant 0 : i32
    return %c0_i32, %c0_i32_0, %c0_i32_1 : i32, i32, i32
  }
  func.func @transform_9(%arg0: i32) -> (i32, i32) {
    %c0_i32 = arith.constant 0 : i32
    %c0_i32_0 = arith.constant 0 : i32
    %c0_i32_1 = arith.constant 0 : i32
    return %c0_i32, %c0_i32_0 : i32, i32
  }
  func.func @transform_10(%arg0: i32) -> (i32, i32, i32) {
    %c0_i32 = arith.constant 0 : i32
    %c0_i32_0 = arith.constant 0 : i32
    %c0_i32_1 = arith.constant 0 : i32
    %c0_i32_2 = arith.constant 0 : i32
    return %c0_i32, %c0_i32_0, %c0_i32_1 : i32, i32, i32
  }
  func.func @transform_11(%arg0: i32) -> (i32, i32) {
    %c0_i32 = arith.constant 0 : i32
    %c0_i32_0 = arith.constant 0 : i32
    %c0_i32_1 = arith.constant 0 : i32
    return %c0_i32, %c0_i32_0 : i32, i32
  }
  func.func @transform_12(%arg0: i32) -> (i32, i32) {
    %c0_i32 = arith.constant 0 : i32
    %c0_i32_0 = arith.constant 0 : i32
    return %arg0, %c0_i32 : i32, i32
  }
  func.func @transform_13(%arg0: i32) -> (i32, i32) {
    %c0_i32 = arith.constant 0 : i32
    %c0_i32_0 = arith.constant 0 : i32
    return %arg0, %c0_i32 : i32, i32
  }
  func.func @transform_14(%arg0: i32) -> (i32, i32) {
    %c0_i32 = arith.constant 0 : i32
    %c0_i32_0 = arith.constant 0 : i32
    return %arg0, %c0_i32 : i32, i32
  }
  func.func @transform_15(%arg0: i32) -> (i32, i32) {
    %c0_i32 = arith.constant 0 : i32
    %c0_i32_0 = arith.constant 0 : i32
    return %arg0, %c0_i32 : i32, i32
  }
  func.func @transform_16(%arg0: i32) -> (i32, i32) {
    %c0_i32 = arith.constant 0 : i32
    %c0_i32_0 = arith.constant 0 : i32
    return %arg0, %c0_i32 : i32, i32
  }
}

</mosaic_0001>

<llo_original>
// kernel: audio_vqvae_forward.1
$region0: #{audio_vqvae_forward.1}
  #allocation0 [shape = 'u32[]', space=smem, size = 0x4, offset = 0x4, fixed_abs, tag = 'smem constant byte address 0x4 - core index']
  #allocation1 [shape = 'u32[144,128]{1,0:T(1,128)}', space=vmem, size = 0x12000, scoped, tag = 'internal scratch']
  %s0 = inlined_call_operand.vmem [shape: f32[32,4], index: 0, kind: input, shape index: {}]
  %s1 = inlined_call_operand.vmem [shape: f32[3,4,32], index: 1, kind: input, shape index: {}]
  %s2 = inlined_call_operand.vmem [shape: f32[1,32], index: 2, kind: input, shape index: {}]
  %s3 = inlined_call_operand.vmem [shape: f32[3,32,16], index: 3, kind: input, shape index: {}]
  %s4 = inlined_call_operand.vmem [shape: f32[1,16], index: 4, kind: input, shape index: {}]
  %s5 = inlined_call_operand.vmem [shape: f32[16,512], index: 5, kind: input, shape index: {}]
  %s6 = inlined_call_operand.vmem [shape: f32[512,16], index: 6, kind: input, shape index: {}]
  %s7 = inlined_call_operand.vmem [shape: f32[1,512], index: 7, kind: input, shape index: {}]
  %s8 = inlined_call_operand.vmem [shape: f32[3,16,32], index: 8, kind: input, shape index: {}]
  %s9 = inlined_call_operand.vmem [shape: f32[1,32], index: 9, kind: input, shape index: {}]
  %s10 = inlined_call_operand.vmem [shape: f32[3,32,4], index: 10, kind: input, shape index: {}]
  %s11 = inlined_call_operand.vmem [shape: f32[1,4], index: 11, kind: input, shape index: {}]
  %s12 = inlined_call_operand.vmem [shape: f32[32,4], index: 12, kind: output, shape index: {0}]
  %s13 = inlined_call_operand.vmem [shape: s32[32,1], index: 13, kind: output, shape index: {1}]
  %s14 = inlined_call_operand.vmem [shape: f32[32,16], index: 14, kind: output, shape index: {2}]
  %s15 = inlined_call_operand.vmem [shape: f32[1,512], index: 15, kind: output, shape index: {3}]
  %s16 = inlined_call_operand.hbm [shape: f32[1,1], index: 16, kind: output, shape index: {4}]
  %17 = xla_tuple %s12, %s13, %s14, %s15, %s16
  %s18 = sld [smem:[#allocation0]]
  $region90: #{audio_vqvae_forward.1} parent=0
    _
  %s20 = ssub.s32 1, %s18
  %s21 = scalar_select 0, %s20, %s18
  $region1: #{audio_vqvae_forward.1} parent=0
    #allocation2 [shape = 'u8[512]{0}', space=vmem, size = 0x400, scoped, tag = 'output window, operand 4, single buffered']
    #allocation3 [shape = 's32[1]{0}', space=sflag, size = 0x4, scoped, tag = 'scoped memory for audio_vqvae_forward.1']
    %22 = vsyncpa [#allocation3], 0
    // Predicated region
    $region2: #{audio_vqvae_forward.1} parent=1 // pred_check
      _
    $region3: #{audio_vqvae_forward.1} parent=1 // pred_check_branch
      %24 = sbr.rel (0) target = $region5
    $region4: #{audio_vqvae_forward.1} parent=1 // pred_region
      _
    $region5: #{audio_vqvae_forward.1} parent=1 // pred_fallthru
      _
    // Predicated region
    $region6: #{audio_vqvae_forward.1} parent=1 // pred_check
      _
    $region7: #{audio_vqvae_forward.1} parent=1 // pred_check_branch
      %26 = sbr.rel (0) target = $region9
    $region8: #{audio_vqvae_forward.1} parent=1 // pred_region
      _
    $region9: #{audio_vqvae_forward.1} parent=1 // pred_fallthru
      _
    // Predicated region
    $region10: #{audio_vqvae_forward.1} parent=1 // pred_check
      _
    $region11: #{audio_vqvae_forward.1} parent=1 // pred_check_branch
      %28 = sbr.rel (0) target = $region13
    $region12: #{audio_vqvae_forward.1} parent=1 // pred_region
      _
    $region13: #{audio_vqvae_forward.1} parent=1 // pred_fallthru
      _
    // Predicated region
    $region14: #{audio_vqvae_forward.1} parent=1 // pred_check
      _
    $region15: #{audio_vqvae_forward.1} parent=1 // pred_check_branch
      %30 = sbr.rel (0) target = $region17
    $region16: #{audio_vqvae_forward.1} parent=1 // pred_region
      _
    $region17: #{audio_vqvae_forward.1} parent=1 // pred_fallthru
      _
    // Predicated region
    $region18: #{audio_vqvae_forward.1} parent=1 // pred_check
      _
    $region19: #{audio_vqvae_forward.1} parent=1 // pred_check_branch
      %32 = sbr.rel (0) target = $region21
    $region20: #{audio_vqvae_forward.1} parent=1 // pred_region
      _
    $region21: #{audio_vqvae_forward.1} parent=1 // pred_fallthru
      _
    // Predicated region
    $region22: #{audio_vqvae_forward.1} parent=1 // pred_check
      _
    $region23: #{audio_vqvae_forward.1} parent=1 // pred_check_branch
      %34 = sbr.rel (0) target = $region25
    $region24: #{audio_vqvae_forward.1} parent=1 // pred_region
      _
    $region25: #{audio_vqvae_forward.1} parent=1 // pred_fallthru
      _
    // Predicated region
    $region26: #{audio_vqvae_forward.1} parent=1 // pred_check
      _
    $region27: #{audio_vqvae_forward.1} parent=1 // pred_check_branch
      %36 = sbr.rel (0) target = $region29
    $region28: #{audio_vqvae_forward.1} parent=1 // pred_region
      _
    $region29: #{audio_vqvae_forward.1} parent=1 // pred_fallthru
      _
    // Predicated region
    $region30: #{audio_vqvae_forward.1} parent=1 // pred_check
      _
    $region31: #{audio_vqvae_forward.1} parent=1 // pred_check_branch
      %38 = sbr.rel (0) target = $region33
    $region32: #{audio_vqvae_forward.1} parent=1 // pred_region
      _
    $region33: #{audio_vqvae_forward.1} parent=1 // pred_fallthru
      _
    // Predicated region
    $region34: #{audio_vqvae_forward.1} parent=1 // pred_check
      _
    $region35: #{audio_vqvae_forward.1} parent=1 // pred_check_branch
      %40 = sbr.rel (0) target = $region37
    $region36: #{audio_vqvae_forward.1} parent=1 // pred_region
      _
    $region37: #{audio_vqvae_forward.1} parent=1 // pred_fallthru
      _
    // Predicated region
    $region38: #{audio_vqvae_forward.1} parent=1 // pred_check
      _
    $region39: #{audio_vqvae_forward.1} parent=1 // pred_check_branch
      %42 = sbr.rel (0) target = $region41
    $region40: #{audio_vqvae_forward.1} parent=1 // pred_region
      _
    $region41: #{audio_vqvae_forward.1} parent=1 // pred_fallthru
      _
    // Predicated region
    $region42: #{audio_vqvae_forward.1} parent=1 // pred_check
      _
    $region43: #{audio_vqvae_forward.1} parent=1 // pred_check_branch
      %44 = sbr.rel (0) target = $region45
    $region44: #{audio_vqvae_forward.1} parent=1 // pred_region
      _
    $region45: #{audio_vqvae_forward.1} parent=1 // pred_fallthru
      _
    // Predicated region
    $region46: #{audio_vqvae_forward.1} parent=1 // pred_check
      _
    $region47: #{audio_vqvae_forward.1} parent=1 // pred_check_branch
      %46 = sbr.rel (0) target = $region49
    $region48: #{audio_vqvae_forward.1} parent=1 // pred_region
      _
    $region49: #{audio_vqvae_forward.1} parent=1 // pred_fallthru
      _
    %v47 = vld [vmem:[%s0] sm:$0xff]
    %v48 = vld [vmem:[%s0 + $0x8] sm:$0xff]
    %v49 = vld [vmem:[%s0 + $0x10] sm:$0xff]
    %v50 = vld [vmem:[%s0 + $0x18] sm:$0xff]
    %v51 = vlaneseq
    %v52 = vshrl.u32 %v51, 7
    %v53 = vadd.s32 %v52, 8
    %v54 = vadd.s32 %v52, 16
    %v55 = vadd.s32 %v52, 24
    %vm56 = vcmp.lt.s32.totalorder %v52, 0
    %v57 = vsub.s32 0, %v52
    %v58 = vsel %vm56, %v57, %v52
    %v59 = vshrl.u32 %v58, 4
    %v60 = vand.u32 %v58, 15
    %v61 = vsub.s32 0, %v60
    %v62 = vsel %vm56, %v61, %v60
    %vm63 = vcmp.lt.s32.totalorder %v53, 0
    %v64 = vsub.s32 0, %v53
    %v65 = vsel %vm63, %v64, %v53
    %v66 = vshrl.u32 %v65, 4
    %v67 = vand.u32 %v65, 15
    %v68 = vsub.s32 0, %v67
    %v69 = vsel %vm63, %v68, %v67
    %vm70 = vcmp.lt.s32.totalorder %v54, 0
    %v71 = vsub.s32 0, %v54
    %v72 = vsel %vm70, %v71, %v54
    %v73 = vshrl.u32 %v72, 4
    %v74 = vand.u32 %v72, 15
    %v75 = vsub.s32 0, %v74
    %v76 = vsel %vm70, %v75, %v74
    %vm77 = vcmp.lt.s32.totalorder %v55, 0
    %v78 = vsub.s32 0, %v55
    %v79 = vsel %vm77, %v78, %v55
    %v80 = vshrl.u32 %v79, 4
    %v81 = vand.u32 %v79, 15
    %v82 = vsub.s32 0, %v81
    %v83 = vsel %vm77, %v82, %v81
    %vm84 = vcmp.ne.s32.totalorder %v62, 0
    %vm85 = vcmp.ne.s32.totalorder %v69, 0
    %vm86 = vcmp.ne.s32.totalorder %v76, 0
    %vm87 = vcmp.ne.s32.totalorder %v83, 0
    %vm88 = vcmp.lt.s32.totalorder %v62, 0
    %vm89 = vcmp.lt.s32.totalorder %v69, 0
    %vm90 = vcmp.lt.s32.totalorder %v76, 0
    %vm91 = vcmp.lt.s32.totalorder %v83, 0
    %vm92 = vmand %vm88, %vm84
    %vm93 = vmand %vm89, %vm85
    %vm94 = vmand %vm90, %vm86
    %vm95 = vmand %vm91, %vm87
    %v96 = vadd.s32 %v62, 16
    %v97 = vadd.s32 %v69, 16
    %v98 = vadd.s32 %v76, 16
    %v99 = vadd.s32 %v83, 16
    %v100 = vsel %vm92, %v96, %v62
    %v101 = vsel %vm93, %v97, %v69
    %v102 = vsel %vm94, %v98, %v76
    %v103 = vsel %vm95, %v99, %v83
    %vm104 = vcmp.eq.s32.totalorder %v100, 0
    %vm105 = vcmp.eq.s32.totalorder %v101, 0
    %vm106 = vcmp.eq.s32.totalorder %v102, 0
    %vm107 = vcmp.eq.s32.totalorder %v103, 0
    %v108 = vrot.slane %v47, 7
    %v109 = vrot.slane %v48, 7
    %v110 = vrot.slane %v49, 7
    %v111 = vrot.slane %v50, 7
    %vm112 = vcmp.lt.s32.totalorder %v52, 1
    %v113 = vsel %vm112, %v110, %v111
    %v114 = vsel %vm112, %v109, %v110
    %v115 = vsel %vm112, %v108, %v109
    %v116 = vsel %vm112, %v111, %v108
    %v117 = vsel %vm104, 0.0, %v116
    %v118 = vsel %vm105, 0.0, %v115
    %v119 = vsel %vm106, 0.0, %v114
    %v120 = vsel %vm107, 0.0, %v113
    %vm121 = vcmp.eq.s32.totalorder %v100, 15
    %vm122 = vcmp.eq.s32.totalorder %v101, 15
    %vm123 = vcmp.eq.s32.totalorder %v102, 15
    %vm124 = vcmp.eq.s32.totalorder %v103, 15
    %v125 = vrot.slane %v47, 1
    %v126 = vrot.slane %v48, 1
    %v127 = vrot.slane %v49, 1
    %v128 = vrot.slane %v50, 1
    %vm129 = vcmp.lt.s32.totalorder %v52, 7
    %v130 = vsel %vm129, %v127, %v128
    %v131 = vsel %vm129, %v126, %v127
    %v132 = vsel %vm129, %v125, %v126
    %v133 = vsel %vm129, %v128, %v125
    %v134 = vsel %vm121, 0.0, %v132
    %v135 = vsel %vm122, 0.0, %v131
    %v136 = vsel %vm123, 0.0, %v130
    %v137 = vsel %vm124, 0.0, %v133
    %v138 = vld [vmem:[%s1] sm:$0xf]
    %s139 = scalar_lea.vmem %s1, 4
    %v140 = vld [vmem:[%s139] sm:$0xf]
    %vm141 = vcmask 31744
    %v143 = vsel %vm141, %v47, 0
    %v146 = vsel %vm141, %v48, 0
    %v149 = vsel %vm141, %v49, 0
    %v152 = vsel %vm141, %v50, 0
    %vm154 = vcmask 1043456
    %v156 = vsel %vm154, %v140, 0
    %158 = vmatprep.subr.mxu0 0.0
    %159 = vmatpush1.msra.mxu0 0.0
    %160 = vmatprep.subr.mxu0 0.0
    %161 = vmatpush1.msra.mxu0 0.0
    %162 = vmatprep.subr.mxu0 0.0
    %163 = vmatpush1.msra.mxu0 0.0
    %164 = vmatprep.subr.mxu0 0.0
    %165 = vmatpush1.msra.mxu0 0.0
    %166 = vmatprep.subr.mxu0 0.0
    %167 = vmatpush1.msra.mxu0 0.0
    %168 = vmatprep.subr.mxu0 0.0
    %169 = vmatpush1.msra.mxu0 0.0
    %170 = vmatprep.subr.mxu0 0.0
    %171 = vmatpush1.msra.mxu0 0.0
    %172 = vmatprep.subr.mxu0 0.0
    %173 = vmatpush1.msra.mxu0 0.0
    %174 = vmatprep.subr.mxu0 0.0
    %175 = vmatpush1.msra.mxu0 0.0
    %176 = vmatprep.subr.mxu0 0.0
    %177 = vmatpush1.msra.mxu0 0.0
    %178 = vmatprep.subr.mxu0 0.0
    %179 = vmatpush1.msra.mxu0 0.0
    %180 = vmatprep.subr.mxu0 0.0
    %181 = vmatpush1.msra.mxu0 0.0
    %182 = vmatprep.subr.mxu0 0.0
    %183 = vmatpush1.msra.mxu0 0.0
    %184 = vmatprep.subr.mxu0 0.0
    %185 = vmatpush1.msra.mxu0 0.0
    %186 = vmatprep.subr.mxu0 0.0
    %187 = vmatpush1.msra.mxu0 0.0
    %188 = vmatprep.subr.mxu0 0.0
    %189 = vmatpush1.msra.mxu0 %v156
    %190 = vmatprep.subr.mxu0 0.0
    %191 = vmatpush2.msra.mxu0 0.0
    %192 = vmatprep.subr.mxu0 0.0
    %193 = vmatpush2.msra.mxu0 0.0
    %194 = vmatprep.subr.mxu0 0.0
    %195 = vmatpush2.msra.mxu0 0.0
    %196 = vmatprep.subr.mxu0 0.0
    %197 = vmatpush2.msra.mxu0 0.0
    %198 = vmatprep.subr.mxu0 0.0
    %199 = vmatpush2.msra.mxu0 0.0
    %200 = vmatprep.subr.mxu0 0.0
    %201 = vmatpush2.msra.mxu0 0.0
    %202 = vmatprep.subr.mxu0 0.0
    %203 = vmatpush2.msra.mxu0 0.0
    %204 = vmatprep.subr.mxu0 0.0
    %205 = vmatpush2.msra.mxu0 0.0
    %206 = vmatprep.subr.mxu0 0.0
    %207 = vmatpush2.msra.mxu0 0.0
    %208 = vmatprep.subr.mxu0 0.0
    %209 = vmatpush2.msra.mxu0 0.0
    %210 = vmatprep.subr.mxu0 0.0
    %211 = vmatpush2.msra.mxu0 0.0
    %212 = vmatprep.subr.mxu0 0.0
    %213 = vmatpush2.msra.mxu0 0.0
    %214 = vmatprep.subr.mxu0 0.0
    %215 = vmatpush2.msra.mxu0 0.0
    %216 = vmatprep.subr.mxu0 0.0
    %217 = vmatpush2.msra.mxu0 0.0
    %218 = vmatprep.subr.mxu0 0.0
    %219 = vmatpush2.msra.mxu0 0.0
    %220 = vmatprep.subr.mxu0 0.0
    %221 = vmatpush2.msra.mxu0 0.0
    %222 = vmatprep.mubr.f32.mxu0 0.0
    %223 = vmatmul.mubr.f32.gmra.mxu0 %v143
    %v224 = vpop.f32.mrf.mxu0
    %v225 = vadd.f32 0.0, %v224
    %v226 = vpop.f32.mrf.mxu0
    %227 = vmatprep.mubr.f32.mxu0 0.0
    %228 = vmatmul.mubr.f32.gmra.mxu0 %v146
    %v229 = vpop.f32.mrf.mxu0
    %v230 = vadd.f32 0.0, %v229
    %v231 = vpop.f32.mrf.mxu0
    %232 = vmatprep.mubr.f32.mxu0 0.0
    %233 = vmatmul.mubr.f32.gmra.mxu0 %v149
    %v234 = vpop.f32.mrf.mxu0
    %v235 = vadd.f32 0.0, %v234
    %v236 = vpop.f32.mrf.mxu0
    %237 = vmatprep.mubr.f32.mxu0 0.0
    %238 = vmatmul.mubr.f32.gmra.mxu0 %v152
    %v239 = vpop.f32.mrf.mxu0
    %v240 = vadd.f32 0.0, %v239
    %v241 = vpop.f32.mrf.mxu0
    %242 = vdwg.mxu0
    %v244 = vsel %vm141, %v117, 0
    %v247 = vsel %vm141, %v118, 0
    %v250 = vsel %vm141, %v119, 0
    %v253 = vsel %vm141, %v120, 0
    %v256 = vsel %vm154, %v138, 0
    %258 = vmatprep.subr.mxu0 0.0
    %259 = vmatpush1.msra.mxu0 0.0
    %260 = vmatprep.subr.mxu0 0.0
    %261 = vmatpush1.msra.mxu0 0.0
    %262 = vmatprep.subr.mxu0 0.0
    %263 = vmatpush1.msra.mxu0 0.0
    %264 = vmatprep.subr.mxu0 0.0
    %265 = vmatpush1.msra.mxu0 0.0
    %266 = vmatprep.subr.mxu0 0.0
    %267 = vmatpush1.msra.mxu0 0.0
    %268 = vmatprep.subr.mxu0 0.0
    %269 = vmatpush1.msra.mxu0 0.0
    %270 = vmatprep.subr.mxu0 0.0
    %271 = vmatpush1.msra.mxu0 0.0
    %272 = vmatprep.subr.mxu0 0.0
    %273 = vmatpush1.msra.mxu0 0.0
    %274 = vmatprep.subr.mxu0 0.0
    %275 = vmatpush1.msra.mxu0 0.0
    %276 = vmatprep.subr.mxu0 0.0
    %277 = vmatpush1.msra.mxu0 0.0
    %278 = vmatprep.subr.mxu0 0.0
    %279 = vmatpush1.msra.mxu0 0.0
    %280 = vmatprep.subr.mxu0 0.0
    %281 = vmatpush1.msra.mxu0 0.0
    %282 = vmatprep.subr.mxu0 0.0
    %283 = vmatpush1.msra.mxu0 0.0
    %284 = vmatprep.subr.mxu0 0.0
    %285 = vmatpush1.msra.mxu0 0.0
    %286 = vmatprep.subr.mxu0 0.0
    %287 = vmatpush1.msra.mxu0 0.0
    %288 = vmatprep.subr.mxu0 0.0
    %289 = vmatpush1.msra.mxu0 %v256
    %290 = vmatprep.subr.mxu0 0.0
    %291 = vmatpush2.msra.mxu0 0.0
    %292 = vmatprep.subr.mxu0 0.0
    %293 = vmatpush2.msra.mxu0 0.0
    %294 = vmatprep.subr.mxu0 0.0
    %295 = vmatpush2.msra.mxu0 0.0
    %296 = vmatprep.subr.mxu0 0.0
    %297 = vmatpush2.msra.mxu0 0.0
    %298 = vmatprep.subr.mxu0 0.0
    %299 = vmatpush2.msra.mxu0 0.0
    %300 = vmatprep.subr.mxu0 0.0
    %301 = vmatpush2.msra.mxu0 0.0
    %302 = vmatprep.subr.mxu0 0.0
    %303 = vmatpush2.msra.mxu0 0.0
    %304 = vmatprep.subr.mxu0 0.0
    %305 = vmatpush2.msra.mxu0 0.0
    %306 = vmatprep.subr.mxu0 0.0
    %307 = vmatpush2.msra.mxu0 0.0
    %308 = vmatprep.subr.mxu0 0.0
    %309 = vmatpush2.msra.mxu0 0.0
    %310 = vmatprep.subr.mxu0 0.0
    %311 = vmatpush2.msra.mxu0 0.0
    %312 = vmatprep.subr.mxu0 0.0
    %313 = vmatpush2.msra.mxu0 0.0
    %314 = vmatprep.subr.mxu0 0.0
    %315 = vmatpush2.msra.mxu0 0.0
    %316 = vmatprep.subr.mxu0 0.0
    %317 = vmatpush2.msra.mxu0 0.0
    %318 = vmatprep.subr.mxu0 0.0
    %319 = vmatpush2.msra.mxu0 0.0
    %320 = vmatprep.subr.mxu0 0.0
    %321 = vmatpush2.msra.mxu0 0.0
    %322 = vmatprep.mubr.f32.mxu0 0.0
    %323 = vmatmul.mubr.f32.gmra.mxu0 %v244
    %v324 = vpop.f32.mrf.mxu0
    %v325 = vadd.f32 %v225, %v324
    %v326 = vpop.f32.mrf.mxu0
    %327 = vmatprep.mubr.f32.mxu0 0.0
    %328 = vmatmul.mubr.f32.gmra.mxu0 %v247
    %v329 = vpop.f32.mrf.mxu0
    %v330 = vadd.f32 %v230, %v329
    %v331 = vpop.f32.mrf.mxu0
    %332 = vmatprep.mubr.f32.mxu0 0.0
    %333 = vmatmul.mubr.f32.gmra.mxu0 %v250
    %v334 = vpop.f32.mrf.mxu0
    %v335 = vadd.f32 %v235, %v334
    %v336 = vpop.f32.mrf.mxu0
    %337 = vmatprep.mubr.f32.mxu0 0.0
    %338 = vmatmul.mubr.f32.gmra.mxu0 %v253
    %v339 = vpop.f32.mrf.mxu0
    %v340 = vadd.f32 %v240, %v339
    %v341 = vpop.f32.mrf.mxu0
    %342 = vdwg.mxu0
    %s343 = scalar_lea.vmem %s1, 8
    %v344 = vld [vmem:[%s343] sm:$0xf]
    %v346 = vsel %vm141, %v134, 0
    %v349 = vsel %vm141, %v135, 0
    %v352 = vsel %vm141, %v136, 0
    %v355 = vsel %vm141, %v137, 0
    %v358 = vsel %vm154, %v344, 0
    %360 = vmatprep.subr.mxu0 0.0
    %361 = vmatpush1.msra.mxu0 0.0
    %362 = vmatprep.subr.mxu0 0.0
    %363 = vmatpush1.msra.mxu0 0.0
    %364 = vmatprep.subr.mxu0 0.0
    %365 = vmatpush1.msra.mxu0 0.0
    %366 = vmatprep.subr.mxu0 0.0
    %367 = vmatpush1.msra.mxu0 0.0
    %368 = vmatprep.subr.mxu0 0.0
    %369 = vmatpush1.msra.mxu0 0.0
    %370 = vmatprep.subr.mxu0 0.0
    %371 = vmatpush1.msra.mxu0 0.0
    %372 = vmatprep.subr.mxu0 0.0
    %373 = vmatpush1.msra.mxu0 0.0
    %374 = vmatprep.subr.mxu0 0.0
    %375 = vmatpush1.msra.mxu0 0.0
    %376 = vmatprep.subr.mxu0 0.0
    %377 = vmatpush1.msra.mxu0 0.0
    %378 = vmatprep.subr.mxu0 0.0
    %379 = vmatpush1.msra.mxu0 0.0
    %380 = vmatprep.subr.mxu0 0.0
    %381 = vmatpush1.msra.mxu0 0.0
    %382 = vmatprep.subr.mxu0 0.0
    %383 = vmatpush1.msra.mxu0 0.0
    %384 = vmatprep.subr.mxu0 0.0
    %385 = vmatpush1.msra.mxu0 0.0
    %386 = vmatprep.subr.mxu0 0.0
    %387 = vmatpush1.msra.mxu0 0.0
    %388 = vmatprep.subr.mxu0 0.0
    %389 = vmatpush1.msra.mxu0 0.0
    %390 = vmatprep.subr.mxu0 0.0
    %391 = vmatpush1.msra.mxu0 %v358
    %392 = vmatprep.subr.mxu0 0.0
    %393 = vmatpush2.msra.mxu0 0.0
    %394 = vmatprep.subr.mxu0 0.0
    %395 = vmatpush2.msra.mxu0 0.0
    %396 = vmatprep.subr.mxu0 0.0
    %397 = vmatpush2.msra.mxu0 0.0
    %398 = vmatprep.subr.mxu0 0.0
    %399 = vmatpush2.msra.mxu0 0.0
    %400 = vmatprep.subr.mxu0 0.0
    %401 = vmatpush2.msra.mxu0 0.0
    %402 = vmatprep.subr.mxu0 0.0
    %403 = vmatpush2.msra.mxu0 0.0
    %404 = vmatprep.subr.mxu0 0.0
    %405 = vmatpush2.msra.mxu0 0.0
    %406 = vmatprep.subr.mxu0 0.0
    %407 = vmatpush2.msra.mxu0 0.0
    %408 = vmatprep.subr.mxu0 0.0
    %409 = vmatpush2.msra.mxu0 0.0
    %410 = vmatprep.subr.mxu0 0.0
    %411 = vmatpush2.msra.mxu0 0.0
    %412 = vmatprep.subr.mxu0 0.0
    %413 = vmatpush2.msra.mxu0 0.0
    %414 = vmatprep.subr.mxu0 0.0
    %415 = vmatpush2.msra.mxu0 0.0
    %416 = vmatprep.subr.mxu0 0.0
    %417 = vmatpush2.msra.mxu0 0.0
    %418 = vmatprep.subr.mxu0 0.0
    %419 = vmatpush2.msra.mxu0 0.0
    %420 = vmatprep.subr.mxu0 0.0
    %421 = vmatpush2.msra.mxu0 0.0
    %422 = vmatprep.subr.mxu0 0.0
    %423 = vmatpush2.msra.mxu0 0.0
    %424 = vmatprep.mubr.f32.mxu0 0.0
    %425 = vmatmul.mubr.f32.gmra.mxu0 %v346
    %v426 = vpop.f32.mrf.mxu0
    %v427 = vadd.f32 0.0, %v426
    %v428 = vpop.f32.mrf.mxu0
    %429 = vmatprep.mubr.f32.mxu0 0.0
    %430 = vmatmul.mubr.f32.gmra.mxu0 %v349
    %v431 = vpop.f32.mrf.mxu0
    %v432 = vadd.f32 0.0, %v431
    %v433 = vpop.f32.mrf.mxu0
    %434 = vmatprep.mubr.f32.mxu0 0.0
    %435 = vmatmul.mubr.f32.gmra.mxu0 %v352
    %v436 = vpop.f32.mrf.mxu0
    %v437 = vadd.f32 0.0, %v436
    %v438 = vpop.f32.mrf.mxu0
    %439 = vmatprep.mubr.f32.mxu0 0.0
    %440 = vmatmul.mubr.f32.gmra.mxu0 %v355
    %v441 = vpop.f32.mrf.mxu0
    %v442 = vadd.f32 0.0, %v441
    %v443 = vpop.f32.mrf.mxu0
    %444 = vdwg.mxu0
    %v445 = vadd.f32 %v325, %v427
    %v446 = vadd.f32 %v330, %v432
    %v447 = vadd.f32 %v335, %v437
    %v448 = vadd.f32 %v340, %v442
    %v449 = vld [vmem:[%s2] sm:$0x1]
    %v451 = vlaneseq
    %v452 = vshrl.u32 %v451, 7
    %v453 = vsub.s32 0, %v452
    %v454 = vrot.slane %v449, %v453
    %v456 = vadd.f32 %v445, %v454
    %v457 = vadd.f32 %v446, %v454
    %v458 = vadd.f32 %v447, %v454
    %v459 = vadd.f32 %v448, %v454
    %v460 = vmax.f32 %v456, 0.0
    %v461 = vmax.f32 %v457, 0.0
    %v462 = vmax.f32 %v458, 0.0
    %v463 = vmax.f32 %v459, 0.0
    %v464 = vrot.slane %v460, 7
    %v465 = vrot.slane %v461, 7
    %v466 = vrot.slane %v462, 7
    %v467 = vrot.slane %v463, 7
    %v468 = vsel %vm112, %v466, %v467
    %v469 = vsel %vm112, %v465, %v466
    %v470 = vsel %vm112, %v464, %v465
    %v471 = vsel %vm112, %v467, %v464
    %v472 = vsel %vm104, 0.0, %v471
    %v473 = vsel %vm105, 0.0, %v470
    %v474 = vsel %vm106, 0.0, %v469
    %v475 = vsel %vm107, 0.0, %v468
    %v476 = vrot.slane %v460, 1
    %v477 = vrot.slane %v461, 1
    %v478 = vrot.slane %v462, 1
    %v479 = vrot.slane %v463, 1
    %v480 = vsel %vm129, %v478, %v479
    %v481 = vsel %vm129, %v477, %v478
    %v482 = vsel %vm129, %v476, %v477
    %v483 = vsel %vm129, %v479, %v476
    %v484 = vsel %vm121, 0.0, %v482
    %v485 = vsel %vm122, 0.0, %v481
    %v486 = vsel %vm123, 0.0, %v480
    %v487 = vsel %vm124, 0.0, %v483
    %v488 = vld [vmem:[%s3] sm:$0xff]
    %v489 = vld [vmem:[%s3 + $0x8] sm:$0xff]
    %v490 = vld [vmem:[%s3 + $0x10] sm:$0xff]
    %v491 = vld [vmem:[%s3 + $0x18] sm:$0xff]
    %s492 = scalar_lea.vmem %s3, 32
    %v493 = vld [vmem:[%s492] sm:$0xff]
    %v494 = vld [vmem:[%s492 + $0x8] sm:$0xff]
    %v495 = vld [vmem:[%s492 + $0x10] sm:$0xff]
    %v496 = vld [vmem:[%s492 + $0x18] sm:$0xff]
    %vm497 = vcmask 261120
    %v499 = vsel %vm497, %v460, 0
    %v502 = vsel %vm497, %v461, 0
    %v505 = vsel %vm497, %v462, 0
    %v508 = vsel %vm497, %v463, 0
    %510 = vmatprep.subr.mxu0 0.0
    %511 = vmatpush1.msra.mxu0 0.0
    %512 = vmatprep.subr.mxu0 0.0
    %513 = vmatpush1.msra.mxu0 0.0
    %514 = vmatprep.subr.mxu0 0.0
    %515 = vmatpush1.msra.mxu0 0.0
    %516 = vmatprep.subr.mxu0 0.0
    %517 = vmatpush1.msra.mxu0 0.0
    %518 = vmatprep.subr.mxu0 0.0
    %519 = vmatpush1.msra.mxu0 0.0
    %520 = vmatprep.subr.mxu0 0.0
    %521 = vmatpush1.msra.mxu0 0.0
    %522 = vmatprep.subr.mxu0 0.0
    %523 = vmatpush1.msra.mxu0 0.0
    %524 = vmatprep.subr.mxu0 0.0
    %525 = vmatpush1.msra.mxu0 0.0
    %526 = vmatprep.subr.mxu0 0.0
    %527 = vmatpush1.msra.mxu0 0.0
    %528 = vmatprep.subr.mxu0 0.0
    %529 = vmatpush1.msra.mxu0 0.0
    %530 = vmatprep.subr.mxu0 0.0
    %531 = vmatpush1.msra.mxu0 0.0
    %532 = vmatprep.subr.mxu0 0.0
    %533 = vmatpush1.msra.mxu0 0.0
    %534 = vmatprep.subr.mxu0 0.0
    %535 = vmatpush1.msra.mxu0 %v496
    %536 = vmatprep.subr.mxu0 0.0
    %537 = vmatpush1.msra.mxu0 %v495
    %538 = vmatprep.subr.mxu0 0.0
    %539 = vmatpush1.msra.mxu0 %v494
    %540 = vmatprep.subr.mxu0 0.0
    %541 = vmatpush1.msra.mxu0 %v493
    %542 = vmatprep.subr.mxu0 0.0
    %543 = vmatpush2.msra.mxu0 0.0
    %544 = vmatprep.subr.mxu0 0.0
    %545 = vmatpush2.msra.mxu0 0.0
    %546 = vmatprep.subr.mxu0 0.0
    %547 = vmatpush2.msra.mxu0 0.0
    %548 = vmatprep.subr.mxu0 0.0
    %549 = vmatpush2.msra.mxu0 0.0
    %550 = vmatprep.subr.mxu0 0.0
    %551 = vmatpush2.msra.mxu0 0.0
    %552 = vmatprep.subr.mxu0 0.0
    %553 = vmatpush2.msra.mxu0 0.0
    %554 = vmatprep.subr.mxu0 0.0
    %555 = vmatpush2.msra.mxu0 0.0
    %556 = vmatprep.subr.mxu0 0.0
    %557 = vmatpush2.msra.mxu0 0.0
    %558 = vmatprep.subr.mxu0 0.0
    %559 = vmatpush2.msra.mxu0 0.0
    %560 = vmatprep.subr.mxu0 0.0
    %561 = vmatpush2.msra.mxu0 0.0
    %562 = vmatprep.subr.mxu0 0.0
    %563 = vmatpush2.msra.mxu0 0.0
    %564 = vmatprep.subr.mxu0 0.0
    %565 = vmatpush2.msra.mxu0 0.0
    %566 = vmatprep.subr.mxu0 0.0
    %567 = vmatpush2.msra.mxu0 0.0
    %568 = vmatprep.subr.mxu0 0.0
    %569 = vmatpush2.msra.mxu0 0.0
    %570 = vmatprep.subr.mxu0 0.0
    %571 = vmatpush2.msra.mxu0 0.0
    %572 = vmatprep.subr.mxu0 0.0
    %573 = vmatpush2.msra.mxu0 0.0
    %574 = vmatprep.mubr.f32.mxu0 0.0
    %575 = vmatmul.mubr.f32.gmra.mxu0 %v499
    %v576 = vpop.f32.mrf.mxu0
    %v577 = vadd.f32 0.0, %v576
    %v578 = vpop.f32.mrf.mxu0
    %579 = vmatprep.mubr.f32.mxu0 0.0
    %580 = vmatmul.mubr.f32.gmra.mxu0 %v502
    %v581 = vpop.f32.mrf.mxu0
    %v582 = vadd.f32 0.0, %v581
    %v583 = vpop.f32.mrf.mxu0
    %584 = vmatprep.mubr.f32.mxu0 0.0
    %585 = vmatmul.mubr.f32.gmra.mxu0 %v505
    %v586 = vpop.f32.mrf.mxu0
    %v587 = vadd.f32 0.0, %v586
    %v588 = vpop.f32.mrf.mxu0
    %589 = vmatprep.mubr.f32.mxu0 0.0
    %590 = vmatmul.mubr.f32.gmra.mxu0 %v508
    %v591 = vpop.f32.mrf.mxu0
    %v592 = vadd.f32 0.0, %v591
    %v593 = vpop.f32.mrf.mxu0
    %594 = vdwg.mxu0
    %v596 = vsel %vm497, %v472, 0
    %v599 = vsel %vm497, %v473, 0
    %v602 = vsel %vm497, %v474, 0
    %v605 = vsel %vm497, %v475, 0
    %607 = vmatprep.subr.mxu0 0.0
    %608 = vmatpush1.msra.mxu0 0.0
    %609 = vmatprep.subr.mxu0 0.0
    %610 = vmatpush1.msra.mxu0 0.0
    %611 = vmatprep.subr.mxu0 0.0
    %612 = vmatpush1.msra.mxu0 0.0
    %613 = vmatprep.subr.mxu0 0.0
    %614 = vmatpush1.msra.mxu0 0.0
    %615 = vmatprep.subr.mxu0 0.0
    %616 = vmatpush1.msra.mxu0 0.0
    %617 = vmatprep.subr.mxu0 0.0
    %618 = vmatpush1.msra.mxu0 0.0
    %619 = vmatprep.subr.mxu0 0.0
    %620 = vmatpush1.msra.mxu0 0.0
    %621 = vmatprep.subr.mxu0 0.0
    %622 = vmatpush1.msra.mxu0 0.0
    %623 = vmatprep.subr.mxu0 0.0
    %624 = vmatpush1.msra.mxu0 0.0
    %625 = vmatprep.subr.mxu0 0.0
    %626 = vmatpush1.msra.mxu0 0.0
    %627 = vmatprep.subr.mxu0 0.0
    %628 = vmatpush1.msra.mxu0 0.0
    %629 = vmatprep.subr.mxu0 0.0
    %630 = vmatpush1.msra.mxu0 0.0
    %631 = vmatprep.subr.mxu0 0.0
    %632 = vmatpush1.msra.mxu0 %v491
    %633 = vmatprep.subr.mxu0 0.0
    %634 = vmatpush1.msra.mxu0 %v490
    %635 = vmatprep.subr.mxu0 0.0
    %636 = vmatpush1.msra.mxu0 %v489
    %637 = vmatprep.subr.mxu0 0.0
    %638 = vmatpush1.msra.mxu0 %v488
    %639 = vmatprep.subr.mxu0 0.0
    %640 = vmatpush2.msra.mxu0 0.0
    %641 = vmatprep.subr.mxu0 0.0
    %642 = vmatpush2.msra.mxu0 0.0
    %643 = vmatprep.subr.mxu0 0.0
    %644 = vmatpush2.msra.mxu0 0.0
    %645 = vmatprep.subr.mxu0 0.0
    %646 = vmatpush2.msra.mxu0 0.0
    %647 = vmatprep.subr.mxu0 0.0
    %648 = vmatpush2.msra.mxu0 0.0
    %649 = vmatprep.subr.mxu0 0.0
    %650 = vmatpush2.msra.mxu0 0.0
    %651 = vmatprep.subr.mxu0 0.0
    %652 = vmatpush2.msra.mxu0 0.0
    %653 = vmatprep.subr.mxu0 0.0
    %654 = vmatpush2.msra.mxu0 0.0
    %655 = vmatprep.subr.mxu0 0.0
    %656 = vmatpush2.msra.mxu0 0.0
    %657 = vmatprep.subr.mxu0 0.0
    %658 = vmatpush2.msra.mxu0 0.0
    %659 = vmatprep.subr.mxu0 0.0
    %660 = vmatpush2.msra.mxu0 0.0
    %661 = vmatprep.subr.mxu0 0.0
    %662 = vmatpush2.msra.mxu0 0.0
    %663 = vmatprep.subr.mxu0 0.0
    %664 = vmatpush2.msra.mxu0 0.0
    %665 = vmatprep.subr.mxu0 0.0
    %666 = vmatpush2.msra.mxu0 0.0
    %667 = vmatprep.subr.mxu0 0.0
    %668 = vmatpush2.msra.mxu0 0.0
    %669 = vmatprep.subr.mxu0 0.0
    %670 = vmatpush2.msra.mxu0 0.0
    %671 = vmatprep.mubr.f32.mxu0 0.0
    %672 = vmatmul.mubr.f32.gmra.mxu0 %v596
    %v673 = vpop.f32.mrf.mxu0
    %v674 = vadd.f32 %v577, %v673
    %v675 = vpop.f32.mrf.mxu0
    %676 = vmatprep.mubr.f32.mxu0 0.0
    %677 = vmatmul.mubr.f32.gmra.mxu0 %v599
    %v678 = vpop.f32.mrf.mxu0
    %v679 = vadd.f32 %v582, %v678
    %v680 = vpop.f32.mrf.mxu0
    %681 = vmatprep.mubr.f32.mxu0 0.0
    %682 = vmatmul.mubr.f32.gmra.mxu0 %v602
    %v683 = vpop.f32.mrf.mxu0
    %v684 = vadd.f32 %v587, %v683
    %v685 = vpop.f32.mrf.mxu0
    %686 = vmatprep.mubr.f32.mxu0 0.0
    %687 = vmatmul.mubr.f32.gmra.mxu0 %v605
    %v688 = vpop.f32.mrf.mxu0
    %v689 = vadd.f32 %v592, %v688
    %v690 = vpop.f32.mrf.mxu0
    %691 = vdwg.mxu0
    %s692 = scalar_lea.vmem %s3, 64
    %v693 = vld [vmem:[%s692] sm:$0xff]
    %v694 = vld [vmem:[%s692 + $0x8] sm:$0xff]
    %v695 = vld [vmem:[%s692 + $0x10] sm:$0xff]
    %v696 = vld [vmem:[%s692 + $0x18] sm:$0xff]
    %v698 = vsel %vm497, %v484, 0
    %v701 = vsel %vm497, %v485, 0
    %v704 = vsel %vm497, %v486, 0
    %v707 = vsel %vm497, %v487, 0
    %709 = vmatprep.subr.mxu0 0.0
    %710 = vmatpush1.msra.mxu0 0.0
    %711 = vmatprep.subr.mxu0 0.0
    %712 = vmatpush1.msra.mxu0 0.0
    %713 = vmatprep.subr.mxu0 0.0
    %714 = vmatpush1.msra.mxu0 0.0
    %715 = vmatprep.subr.mxu0 0.0
    %716 = vmatpush1.msra.mxu0 0.0
    %717 = vmatprep.subr.mxu0 0.0
    %718 = vmatpush1.msra.mxu0 0.0
    %719 = vmatprep.subr.mxu0 0.0
    %720 = vmatpush1.msra.mxu0 0.0
    %721 = vmatprep.subr.mxu0 0.0
    %722 = vmatpush1.msra.mxu0 0.0
    %723 = vmatprep.subr.mxu0 0.0
    %724 = vmatpush1.msra.mxu0 0.0
    %725 = vmatprep.subr.mxu0 0.0
    %726 = vmatpush1.msra.mxu0 0.0
    %727 = vmatprep.subr.mxu0 0.0
    %728 = vmatpush1.msra.mxu0 0.0
    %729 = vmatprep.subr.mxu0 0.0
    %730 = vmatpush1.msra.mxu0 0.0
    %731 = vmatprep.subr.mxu0 0.0
    %732 = vmatpush1.msra.mxu0 0.0
    %733 = vmatprep.subr.mxu0 0.0
    %734 = vmatpush1.msra.mxu0 %v696
    %735 = vmatprep.subr.mxu0 0.0
    %736 = vmatpush1.msra.mxu0 %v695
    %737 = vmatprep.subr.mxu0 0.0
    %738 = vmatpush1.msra.mxu0 %v694
    %739 = vmatprep.subr.mxu0 0.0
    %740 = vmatpush1.msra.mxu0 %v693
    %741 = vmatprep.subr.mxu0 0.0
    %742 = vmatpush2.msra.mxu0 0.0
    %743 = vmatprep.subr.mxu0 0.0
    %744 = vmatpush2.msra.mxu0 0.0
    %745 = vmatprep.subr.mxu0 0.0
    %746 = vmatpush2.msra.mxu0 0.0
    %747 = vmatprep.subr.mxu0 0.0
    %748 = vmatpush2.msra.mxu0 0.0
    %749 = vmatprep.subr.mxu0 0.0
    %750 = vmatpush2.msra.mxu0 0.0
    %751 = vmatprep.subr.mxu0 0.0
    %752 = vmatpush2.msra.mxu0 0.0
    %753 = vmatprep.subr.mxu0 0.0
    %754 = vmatpush2.msra.mxu0 0.0
    %755 = vmatprep.subr.mxu0 0.0
    %756 = vmatpush2.msra.mxu0 0.0
    %757 = vmatprep.subr.mxu0 0.0
    %758 = vmatpush2.msra.mxu0 0.0
    %759 = vmatprep.subr.mxu0 0.0
    %760 = vmatpush2.msra.mxu0 0.0
    %761 = vmatprep.subr.mxu0 0.0
    %762 = vmatpush2.msra.mxu0 0.0
    %763 = vmatprep.subr.mxu0 0.0
    %764 = vmatpush2.msra.mxu0 0.0
    %765 = vmatprep.subr.mxu0 0.0
    %766 = vmatpush2.msra.mxu0 0.0
    %767 = vmatprep.subr.mxu0 0.0
    %768 = vmatpush2.msra.mxu0 0.0
    %769 = vmatprep.subr.mxu0 0.0
    %770 = vmatpush2.msra.mxu0 0.0
    %771 = vmatprep.subr.mxu0 0.0
    %772 = vmatpush2.msra.mxu0 0.0
    %773 = vmatprep.mubr.f32.mxu0 0.0
    %774 = vmatmul.mubr.f32.gmra.mxu0 %v698
    %v775 = vpop.f32.mrf.mxu0
    %v776 = vadd.f32 0.0, %v775
    %v777 = vpop.f32.mrf.mxu0
    %778 = vmatprep.mubr.f32.mxu0 0.0
    %779 = vmatmul.mubr.f32.gmra.mxu0 %v701
    %v780 = vpop.f32.mrf.mxu0
    %v781 = vadd.f32 0.0, %v780
    %v782 = vpop.f32.mrf.mxu0
    %783 = vmatprep.mubr.f32.mxu0 0.0
    %784 = vmatmul.mubr.f32.gmra.mxu0 %v704
    %v785 = vpop.f32.mrf.mxu0
    %v786 = vadd.f32 0.0, %v785
    %v787 = vpop.f32.mrf.mxu0
    %788 = vmatprep.mubr.f32.mxu0 0.0
    %789 = vmatmul.mubr.f32.gmra.mxu0 %v707
    %v790 = vpop.f32.mrf.mxu0
    %v791 = vadd.f32 0.0, %v790
    %v792 = vpop.f32.mrf.mxu0
    %793 = vdwg.mxu0
    %v794 = vadd.f32 %v674, %v776
    %v795 = vadd.f32 %v679, %v781
    %v796 = vadd.f32 %v684, %v786
    %v797 = vadd.f32 %v689, %v791
    %v798 = vld [vmem:[%s4] sm:$0x1]
    %v800 = vlaneseq
    %v801 = vshrl.u32 %v800, 7
    %v802 = vsub.s32 0, %v801
    %v803 = vrot.slane %v798, %v802
    %v805 = vadd.f32 %v794, %v803
    %v806 = vadd.f32 %v795, %v803
    %v807 = vadd.f32 %v796, %v803
    %v808 = vadd.f32 %v797, %v803
    %v809 = vld [vmem:[%s5] sm:$0xff]
    %v810 = vld [vmem:[%s5 + $0x8] sm:$0xff]
    %v811 = vld [vmem:[%s5 + $0x10] sm:$0xff]
    %v812 = vld [vmem:[%s5 + $0x18] sm:$0xff]
    %v813 = vld [vmem:[%s5 + $0x20] sm:$0xff]
    %v814 = vld [vmem:[%s5 + $0x28] sm:$0xff]
    %v815 = vld [vmem:[%s5 + $0x30] sm:$0xff]
    %v816 = vld [vmem:[%s5 + $0x38] sm:$0xff]
    %vm817 = vcmask 130048
    %v819 = vsel %vm817, %v805, 0
    %v822 = vsel %vm817, %v806, 0
    %v825 = vsel %vm817, %v807, 0
    %v828 = vsel %vm817, %v808, 0
    %830 = vmatprep.subr.mxu0 0.0
    %831 = vmatpush1.msra.mxu0 0.0
    %832 = vmatprep.subr.mxu0 0.0
    %833 = vmatpush1.msra.mxu0 0.0
    %834 = vmatprep.subr.mxu0 0.0
    %835 = vmatpush1.msra.mxu0 0.0
    %836 = vmatprep.subr.mxu0 0.0
    %837 = vmatpush1.msra.mxu0 0.0
    %838 = vmatprep.subr.mxu0 0.0
    %839 = vmatpush1.msra.mxu0 0.0
    %840 = vmatprep.subr.mxu0 0.0
    %841 = vmatpush1.msra.mxu0 0.0
    %842 = vmatprep.subr.mxu0 0.0
    %843 = vmatpush1.msra.mxu0 0.0
    %844 = vmatprep.subr.mxu0 0.0
    %845 = vmatpush1.msra.mxu0 0.0
    %846 = vmatprep.subr.mxu0 0.0
    %847 = vmatpush1.msra.mxu0 0.0
    %848 = vmatprep.subr.mxu0 0.0
    %849 = vmatpush1.msra.mxu0 0.0
    %850 = vmatprep.subr.mxu0 0.0
    %851 = vmatpush1.msra.mxu0 0.0
    %852 = vmatprep.subr.mxu0 0.0
    %853 = vmatpush1.msra.mxu0 0.0
    %854 = vmatprep.subr.mxu0 0.0
    %855 = vmatpush1.msra.mxu0 0.0
    %856 = vmatprep.subr.mxu0 0.0
    %857 = vmatpush1.msra.mxu0 0.0
    %858 = vmatprep.subr.mxu0 %v814
    %859 = vmatpush1.msra.mxu0 %v813
    %860 = vmatprep.subr.mxu0 %v810
    %861 = vmatpush1.msra.mxu0 %v809
    %862 = vmatprep.subr.mxu0 0.0
    %863 = vmatpush2.msra.mxu0 0.0
    %864 = vmatprep.subr.mxu0 0.0
    %865 = vmatpush2.msra.mxu0 0.0
    %866 = vmatprep.subr.mxu0 0.0
    %867 = vmatpush2.msra.mxu0 0.0
    %868 = vmatprep.subr.mxu0 0.0
    %869 = vmatpush2.msra.mxu0 0.0
    %870 = vmatprep.subr.mxu0 0.0
    %871 = vmatpush2.msra.mxu0 0.0
    %872 = vmatprep.subr.mxu0 0.0
    %873 = vmatpush2.msra.mxu0 0.0
    %874 = vmatprep.subr.mxu0 0.0
    %875 = vmatpush2.msra.mxu0 0.0
    %876 = vmatprep.subr.mxu0 0.0
    %877 = vmatpush2.msra.mxu0 0.0
    %878 = vmatprep.subr.mxu0 0.0
    %879 = vmatpush2.msra.mxu0 0.0
    %880 = vmatprep.subr.mxu0 0.0
    %881 = vmatpush2.msra.mxu0 0.0
    %882 = vmatprep.subr.mxu0 0.0
    %883 = vmatpush2.msra.mxu0 0.0
    %884 = vmatprep.subr.mxu0 0.0
    %885 = vmatpush2.msra.mxu0 0.0
    %886 = vmatprep.subr.mxu0 0.0
    %887 = vmatpush2.msra.mxu0 0.0
    %888 = vmatprep.subr.mxu0 0.0
    %889 = vmatpush2.msra.mxu0 0.0
    %890 = vmatprep.subr.mxu0 0.0
    %891 = vmatpush2.msra.mxu0 0.0
    %892 = vmatprep.subr.mxu0 0.0
    %893 = vmatpush2.msra.mxu0 0.0
    %894 = vmatprep.mubr.f32.mxu0 0.0
    %895 = vmatmul.mubr.f32.gmra.mxu0 %v819
    %v896 = vpop.f32.mrf.mxu0
    %v897 = vadd.f32 0.0, %v896
    %v898 = vpop.f32.mrf.mxu0
    %v899 = vadd.f32 0.0, %v898
    %900 = vmatprep.mubr.f32.mxu0 0.0
    %901 = vmatmul.mubr.f32.gmra.mxu0 %v822
    %v902 = vpop.f32.mrf.mxu0
    %v903 = vadd.f32 0.0, %v902
    %v904 = vpop.f32.mrf.mxu0
    %v905 = vadd.f32 0.0, %v904
    %906 = vmatprep.mubr.f32.mxu0 0.0
    %907 = vmatmul.mubr.f32.gmra.mxu0 %v825
    %v908 = vpop.f32.mrf.mxu0
    %v909 = vadd.f32 0.0, %v908
    %v910 = vpop.f32.mrf.mxu0
    %v911 = vadd.f32 0.0, %v910
    %912 = vmatprep.mubr.f32.mxu0 0.0
    %913 = vmatmul.mubr.f32.gmra.mxu0 %v828
    %v914 = vpop.f32.mrf.mxu0
    %v915 = vadd.f32 0.0, %v914
    %v916 = vpop.f32.mrf.mxu0
    %v917 = vadd.f32 0.0, %v916
    %918 = vdwg.mxu0
    %919 = vmatprep.subr.mxu0 0.0
    %920 = vmatpush1.msra.mxu0 0.0
    %921 = vmatprep.subr.mxu0 0.0
    %922 = vmatpush1.msra.mxu0 0.0
    %923 = vmatprep.subr.mxu0 0.0
    %924 = vmatpush1.msra.mxu0 0.0
    %925 = vmatprep.subr.mxu0 0.0
    %926 = vmatpush1.msra.mxu0 0.0
    %927 = vmatprep.subr.mxu0 0.0
    %928 = vmatpush1.msra.mxu0 0.0
    %929 = vmatprep.subr.mxu0 0.0
    %930 = vmatpush1.msra.mxu0 0.0
    %931 = vmatprep.subr.mxu0 0.0
    %932 = vmatpush1.msra.mxu0 0.0
    %933 = vmatprep.subr.mxu0 0.0
    %934 = vmatpush1.msra.mxu0 0.0
    %935 = vmatprep.subr.mxu0 0.0
    %936 = vmatpush1.msra.mxu0 0.0
    %937 = vmatprep.subr.mxu0 0.0
    %938 = vmatpush1.msra.mxu0 0.0
    %939 = vmatprep.subr.mxu0 0.0
    %940 = vmatpush1.msra.mxu0 0.0
    %941 = vmatprep.subr.mxu0 0.0
    %942 = vmatpush1.msra.mxu0 0.0
    %943 = vmatprep.subr.mxu0 0.0
    %944 = vmatpush1.msra.mxu0 0.0
    %945 = vmatprep.subr.mxu0 0.0
    %946 = vmatpush1.msra.mxu0 0.0
    %947 = vmatprep.subr.mxu0 %v816
    %948 = vmatpush1.msra.mxu0 %v815
    %949 = vmatprep.subr.mxu0 %v812
    %950 = vmatpush1.msra.mxu0 %v811
    %951 = vmatprep.subr.mxu0 0.0
    %952 = vmatpush2.msra.mxu0 0.0
    %953 = vmatprep.subr.mxu0 0.0
    %954 = vmatpush2.msra.mxu0 0.0
    %955 = vmatprep.subr.mxu0 0.0
    %956 = vmatpush2.msra.mxu0 0.0
    %957 = vmatprep.subr.mxu0 0.0
    %958 = vmatpush2.msra.mxu0 0.0
    %959 = vmatprep.subr.mxu0 0.0
    %960 = vmatpush2.msra.mxu0 0.0
    %961 = vmatprep.subr.mxu0 0.0
    %962 = vmatpush2.msra.mxu0 0.0
    %963 = vmatprep.subr.mxu0 0.0
    %964 = vmatpush2.msra.mxu0 0.0
    %965 = vmatprep.subr.mxu0 0.0
    %966 = vmatpush2.msra.mxu0 0.0
    %967 = vmatprep.subr.mxu0 0.0
    %968 = vmatpush2.msra.mxu0 0.0
    %969 = vmatprep.subr.mxu0 0.0
    %970 = vmatpush2.msra.mxu0 0.0
    %971 = vmatprep.subr.mxu0 0.0
    %972 = vmatpush2.msra.mxu0 0.0
    %973 = vmatprep.subr.mxu0 0.0
    %974 = vmatpush2.msra.mxu0 0.0
    %975 = vmatprep.subr.mxu0 0.0
    %976 = vmatpush2.msra.mxu0 0.0
    %977 = vmatprep.subr.mxu0 0.0
    %978 = vmatpush2.msra.mxu0 0.0
    %979 = vmatprep.subr.mxu0 0.0
    %980 = vmatpush2.msra.mxu0 0.0
    %981 = vmatprep.subr.mxu0 0.0
    %982 = vmatpush2.msra.mxu0 0.0
    %983 = vmatprep.mubr.f32.mxu0 0.0
    %984 = vmatmul.mubr.f32.gmra.mxu0 %v819
    %v985 = vpop.f32.mrf.mxu0
    %v986 = vadd.f32 0.0, %v985
    %v987 = vpop.f32.mrf.mxu0
    %v988 = vadd.f32 0.0, %v987
    %989 = vmatprep.mubr.f32.mxu0 0.0
    %990 = vmatmul.mubr.f32.gmra.mxu0 %v822
    %v991 = vpop.f32.mrf.mxu0
    %v992 = vadd.f32 0.0, %v991
    %v993 = vpop.f32.mrf.mxu0
    %v994 = vadd.f32 0.0, %v993
    %995 = vmatprep.mubr.f32.mxu0 0.0
    %996 = vmatmul.mubr.f32.gmra.mxu0 %v825
    %v997 = vpop.f32.mrf.mxu0
    %v998 = vadd.f32 0.0, %v997
    %v999 = vpop.f32.mrf.mxu0
    %v1000 = vadd.f32 0.0, %v999
    %1001 = vmatprep.mubr.f32.mxu0 0.0
    %1002 = vmatmul.mubr.f32.gmra.mxu0 %v828
    %v1003 = vpop.f32.mrf.mxu0
    %v1004 = vadd.f32 0.0, %v1003
    %v1005 = vpop.f32.mrf.mxu0
    %v1006 = vadd.f32 0.0, %v1005
    %1007 = vdwg.mxu0
    %v1008 = vld [vmem:[%s7] sm:$0xf]
    %v1009 = vmul.f32 %v897, 2.0
    %v1010 = vmul.f32 %v899, 2.0
    %v1011 = vmul.f32 %v986, 2.0
    %v1012 = vmul.f32 %v988, 2.0
    %v1013 = vmul.f32 %v903, 2.0
    %v1014 = vmul.f32 %v905, 2.0
    %v1015 = vmul.f32 %v992, 2.0
    %v1016 = vmul.f32 %v994, 2.0
    %v1017 = vmul.f32 %v909, 2.0
    %v1018 = vmul.f32 %v911, 2.0
    %v1019 = vmul.f32 %v998, 2.0
    %v1020 = vmul.f32 %v1000, 2.0
    %v1021 = vmul.f32 %v915, 2.0
    %v1022 = vmul.f32 %v917, 2.0
    %v1023 = vmul.f32 %v1004, 2.0
    %v1024 = vmul.f32 %v1006, 2.0
    %v1026 = vlaneseq
    %v1027 = vshrl.u32 %v1026, 7
    %v1028 = vsub.s32 0, %v1027
    %v1029 = vrot.slane %v1008, %v1028
    %v1030 = vlaneseq
    %v1031 = vshrl.u32 %v1030, 7
    %v1032 = vsub.s32 1, %v1031
    %v1033 = vrot.slane %v1008, %v1032
    %v1034 = vlaneseq
    %v1035 = vshrl.u32 %v1034, 7
    %v1036 = vsub.s32 2, %v1035
    %v1037 = vrot.slane %v1008, %v1036
    %v1038 = vlaneseq
    %v1039 = vshrl.u32 %v1038, 7
    %v1040 = vsub.s32 3, %v1039
    %v1041 = vrot.slane %v1008, %v1040
    %v1046 = vsub.f32 %v1029, %v1009
    %v1047 = vsub.f32 %v1033, %v1010
    %v1048 = vsub.f32 %v1037, %v1011
    %v1049 = vsub.f32 %v1041, %v1012
    %v1050 = vsub.f32 %v1029, %v1013
    %v1051 = vsub.f32 %v1033, %v1014
    %v1052 = vsub.f32 %v1037, %v1015
    %v1053 = vsub.f32 %v1041, %v1016
    %v1054 = vsub.f32 %v1029, %v1017
    %v1055 = vsub.f32 %v1033, %v1018
    %v1056 = vsub.f32 %v1037, %v1019
    %v1057 = vsub.f32 %v1041, %v1020
    %v1058 = vsub.f32 %v1029, %v1021
    %v1059 = vsub.f32 %v1033, %v1022
    %v1060 = vsub.f32 %v1037, %v1023
    %v1061 = vsub.f32 %v1041, %v1024
    %v1062 = vmin.f32 %v1046, %v1047
    %v1063 = vmin.f32 %v1062, %v1048
    %v1064 = vmin.f32 %v1063, %v1049
    %1065 = vmin.xlane.f32.xlu0 %v1064
    %v1066 = vpop.xlane.xlu0 %1065
    %v1067 = vmin.f32 %v1050, %v1051
    %v1068 = vmin.f32 %v1067, %v1052
    %v1069 = vmin.f32 %v1068, %v1053
    %1070 = vmin.xlane.f32.xlu0 %v1069
    %v1071 = vpop.xlane.xlu0 %1070
    %v1072 = vmin.f32 %v1054, %v1055
    %v1073 = vmin.f32 %v1072, %v1056
    %v1074 = vmin.f32 %v1073, %v1057
    %1075 = vmin.xlane.f32.xlu0 %v1074
    %v1076 = vpop.xlane.xlu0 %1075
    %v1077 = vmin.f32 %v1058, %v1059
    %v1078 = vmin.f32 %v1077, %v1060
    %v1079 = vmin.f32 %v1078, %v1061
    %1080 = vmin.xlane.f32.xlu0 %v1079
    %v1081 = vpop.xlane.xlu0 %1080
    %v1082 = vlaneseq
    %v1083 = vand.u32 %v1082, 127
    %v1084 = vadd.s32 %v1083, 128
    %v1085 = vadd.s32 %v1083, 256
    %v1086 = vadd.s32 %v1083, 384
    %vm1087 = vcmp.le.f32.partialorder %v1046, %v1066
    %vm1088 = vcmp.le.f32.partialorder %v1047, %v1066
    %vm1089 = vcmp.le.f32.partialorder %v1048, %v1066
    %vm1090 = vcmp.le.f32.partialorder %v1049, %v1066
    %vm1091 = vcmp.le.f32.partialorder %v1050, %v1071
    %vm1092 = vcmp.le.f32.partialorder %v1051, %v1071
    %vm1093 = vcmp.le.f32.partialorder %v1052, %v1071
    %vm1094 = vcmp.le.f32.partialorder %v1053, %v1071
    %vm1095 = vcmp.le.f32.partialorder %v1054, %v1076
    %vm1096 = vcmp.le.f32.partialorder %v1055, %v1076
    %vm1097 = vcmp.le.f32.partialorder %v1056, %v1076
    %vm1098 = vcmp.le.f32.partialorder %v1057, %v1076
    %vm1099 = vcmp.le.f32.partialorder %v1058, %v1081
    %vm1100 = vcmp.le.f32.partialorder %v1059, %v1081
    %vm1101 = vcmp.le.f32.partialorder %v1060, %v1081
    %vm1102 = vcmp.le.f32.partialorder %v1061, %v1081
    %v1103 = vsel %vm1087, %v1083, 512
    %v1104 = vsel %vm1088, %v1084, 512
    %v1105 = vsel %vm1089, %v1085, 512
    %v1106 = vsel %vm1090, %v1086, 512
    %v1107 = vsel %vm1091, %v1083, 512
    %v1108 = vsel %vm1092, %v1084, 512
    %v1109 = vsel %vm1093, %v1085, 512
    %v1110 = vsel %vm1094, %v1086, 512
    %v1111 = vsel %vm1095, %v1083, 512
    %v1112 = vsel %vm1096, %v1084, 512
    %v1113 = vsel %vm1097, %v1085, 512
    %v1114 = vsel %vm1098, %v1086, 512
    %v1115 = vsel %vm1099, %v1083, 512
    %v1116 = vsel %vm1100, %v1084, 512
    %v1117 = vsel %vm1101, %v1085, 512
    %v1118 = vsel %vm1102, %v1086, 512
    %vm1119 = vcmp.lt.s32.totalorder %v1103, %v1104
    %v1120 = vsel %vm1119, %v1103, %v1104
    %vm1121 = vcmp.lt.s32.totalorder %v1120, %v1105
    %v1122 = vsel %vm1121, %v1120, %v1105
    %vm1123 = vcmp.lt.s32.totalorder %v1122, %v1106
    %v1124 = vsel %vm1123, %v1122, %v1106
    %v1125 = vand.u32 %v1124, 65535
    %v1126 = vshra.s32 %v1124, 16
    %v1127 = vcvt.s32.f32 %v1125
    %v1128 = vcvt.s32.f32 %v1126
    %1129 = vmin.xlane.f32.xlu0 %v1128
    %v1130 = vpop.xlane.xlu0 %1129
    %vm1131 = vcmp.eq.f32.partialorder %v1128, %v1130
    %v1132 = vsel %vm1131, %v1127, inf
    %1133 = vmin.xlane.f32.xlu0 %v1132
    %v1134 = vpop.xlane.xlu0 %1133
    %v1135 = vcvt.f32.s32 %v1134
    %v1136 = vcvt.f32.s32 %v1130
    %v1137 = vshll.u32 %v1136, 16
    %v1138 = vadd.s32 %v1137, %v1135
    %vm1139 = vcmp.lt.s32.totalorder %v1107, %v1108
    %v1140 = vsel %vm1139, %v1107, %v1108
    %vm1141 = vcmp.lt.s32.totalorder %v1140, %v1109
    %v1142 = vsel %vm1141, %v1140, %v1109
    %vm1143 = vcmp.lt.s32.totalorder %v1142, %v1110
    %v1144 = vsel %vm1143, %v1142, %v1110
    %v1145 = vand.u32 %v1144, 65535
    %v1146 = vshra.s32 %v1144, 16
    %v1147 = vcvt.s32.f32 %v1145
    %v1148 = vcvt.s32.f32 %v1146
    %1149 = vmin.xlane.f32.xlu0 %v1148
    %v1150 = vpop.xlane.xlu0 %1149
    %vm1151 = vcmp.eq.f32.partialorder %v1148, %v1150
    %v1152 = vsel %vm1151, %v1147, inf
    %1153 = vmin.xlane.f32.xlu0 %v1152
    %v1154 = vpop.xlane.xlu0 %1153
    %v1155 = vcvt.f32.s32 %v1154
    %v1156 = vcvt.f32.s32 %v1150
    %v1157 = vshll.u32 %v1156, 16
    %v1158 = vadd.s32 %v1157, %v1155
    %vm1159 = vcmp.lt.s32.totalorder %v1111, %v1112
    %v1160 = vsel %vm1159, %v1111, %v1112
    %vm1161 = vcmp.lt.s32.totalorder %v1160, %v1113
    %v1162 = vsel %vm1161, %v1160, %v1113
    %vm1163 = vcmp.lt.s32.totalorder %v1162, %v1114
    %v1164 = vsel %vm1163, %v1162, %v1114
    %v1165 = vand.u32 %v1164, 65535
    %v1166 = vshra.s32 %v1164, 16
    %v1167 = vcvt.s32.f32 %v1165
    %v1168 = vcvt.s32.f32 %v1166
    %1169 = vmin.xlane.f32.xlu0 %v1168
    %v1170 = vpop.xlane.xlu0 %1169
    %vm1171 = vcmp.eq.f32.partialorder %v1168, %v1170
    %v1172 = vsel %vm1171, %v1167, inf
    %1173 = vmin.xlane.f32.xlu0 %v1172
    %v1174 = vpop.xlane.xlu0 %1173
    %v1175 = vcvt.f32.s32 %v1174
    %v1176 = vcvt.f32.s32 %v1170
    %v1177 = vshll.u32 %v1176, 16
    %v1178 = vadd.s32 %v1177, %v1175
    %vm1179 = vcmp.lt.s32.totalorder %v1115, %v1116
    %v1180 = vsel %vm1179, %v1115, %v1116
    %vm1181 = vcmp.lt.s32.totalorder %v1180, %v1117
    %v1182 = vsel %vm1181, %v1180, %v1117
    %vm1183 = vcmp.lt.s32.totalorder %v1182, %v1118
    %v1184 = vsel %vm1183, %v1182, %v1118
    %v1185 = vand.u32 %v1184, 65535
    %v1186 = vshra.s32 %v1184, 16
    %v1187 = vcvt.s32.f32 %v1185
    %v1188 = vcvt.s32.f32 %v1186
    %1189 = vmin.xlane.f32.xlu0 %v1188
    %v1190 = vpop.xlane.xlu0 %1189
    %vm1191 = vcmp.eq.f32.partialorder %v1188, %v1190
    %v1192 = vsel %vm1191, %v1187, inf
    %1193 = vmin.xlane.f32.xlu0 %v1192
    %v1194 = vpop.xlane.xlu0 %1193
    %v1195 = vcvt.f32.s32 %v1194
    %v1196 = vcvt.f32.s32 %v1190
    %v1197 = vshll.u32 %v1196, 16
    %v1198 = vadd.s32 %v1197, %v1195
    %vm1199 = vcmp.eq.s32.totalorder %v1083, %v1138
    %vm1200 = vcmp.eq.s32.totalorder %v1084, %v1138
    %vm1201 = vcmp.eq.s32.totalorder %v1085, %v1138
    %vm1202 = vcmp.eq.s32.totalorder %v1086, %v1138
    %vm1203 = vcmp.eq.s32.totalorder %v1083, %v1158
    %vm1204 = vcmp.eq.s32.totalorder %v1084, %v1158
    %vm1205 = vcmp.eq.s32.totalorder %v1085, %v1158
    %vm1206 = vcmp.eq.s32.totalorder %v1086, %v1158
    %vm1207 = vcmp.eq.s32.totalorder %v1083, %v1178
    %vm1208 = vcmp.eq.s32.totalorder %v1084, %v1178
    %vm1209 = vcmp.eq.s32.totalorder %v1085, %v1178
    %vm1210 = vcmp.eq.s32.totalorder %v1086, %v1178
    %vm1211 = vcmp.eq.s32.totalorder %v1083, %v1198
    %vm1212 = vcmp.eq.s32.totalorder %v1084, %v1198
    %vm1213 = vcmp.eq.s32.totalorder %v1085, %v1198
    %vm1214 = vcmp.eq.s32.totalorder %v1086, %v1198
    %v1215 = vsel %vm1199, 1, 0
    %v1216 = vsel %vm1200, 1, 0
    %v1217 = vsel %vm1201, 1, 0
    %v1218 = vsel %vm1202, 1, 0
    %v1219 = vsel %vm1203, 1, 0
    %v1220 = vsel %vm1204, 1, 0
    %v1221 = vsel %vm1205, 1, 0
    %v1222 = vsel %vm1206, 1, 0
    %v1223 = vsel %vm1207, 1, 0
    %v1224 = vsel %vm1208, 1, 0
    %v1225 = vsel %vm1209, 1, 0
    %v1226 = vsel %vm1210, 1, 0
    %v1227 = vsel %vm1211, 1, 0
    %v1228 = vsel %vm1212, 1, 0
    %v1229 = vsel %vm1213, 1, 0
    %v1230 = vsel %vm1214, 1, 0
    %v1231 = vcvt.s32.f32 %v1215
    %v1232 = vcvt.s32.f32 %v1216
    %v1233 = vcvt.s32.f32 %v1217
    %v1234 = vcvt.s32.f32 %v1218
    %v1235 = vcvt.s32.f32 %v1219
    %v1236 = vcvt.s32.f32 %v1220
    %v1237 = vcvt.s32.f32 %v1221
    %v1238 = vcvt.s32.f32 %v1222
    %v1239 = vcvt.s32.f32 %v1223
    %v1240 = vcvt.s32.f32 %v1224
    %v1241 = vcvt.s32.f32 %v1225
    %v1242 = vcvt.s32.f32 %v1226
    %v1243 = vcvt.s32.f32 %v1227
    %v1244 = vcvt.s32.f32 %v1228
    %v1245 = vcvt.s32.f32 %v1229
    %v1246 = vcvt.s32.f32 %v1230
    %v1247 = vld [vmem:[%s6] sm:$0xff]
    %v1248 = vld [vmem:[%s6 + $0x8] sm:$0xff]
    %v1249 = vld [vmem:[%s6 + $0x10] sm:$0xff]
    %v1250 = vld [vmem:[%s6 + $0x18] sm:$0xff]
    %v1251 = vld [vmem:[%s6 + $0x20] sm:$0xff]
    %v1252 = vld [vmem:[%s6 + $0x28] sm:$0xff]
    %v1253 = vld [vmem:[%s6 + $0x30] sm:$0xff]
    %v1254 = vld [vmem:[%s6 + $0x38] sm:$0xff]
    %v1255 = vld [vmem:[%s6 + $0x40] sm:$0xff]
    %v1256 = vld [vmem:[%s6 + $0x48] sm:$0xff]
    %v1257 = vld [vmem:[%s6 + $0x50] sm:$0xff]
    %v1258 = vld [vmem:[%s6 + $0x58] sm:$0xff]
    %v1259 = vld [vmem:[%s6 + $0x60] sm:$0xff]
    %v1260 = vld [vmem:[%s6 + $0x68] sm:$0xff]
    %v1261 = vld [vmem:[%s6 + $0x70] sm:$0xff]
    %v1262 = vld [vmem:[%s6 + $0x78] sm:$0xff]
    %v1263 = vld [vmem:[%s6 + $0x80] sm:$0xff]
    %v1264 = vld [vmem:[%s6 + $0x88] sm:$0xff]
    %v1265 = vld [vmem:[%s6 + $0x90] sm:$0xff]
    %v1266 = vld [vmem:[%s6 + $0x98] sm:$0xff]
    %v1267 = vld [vmem:[%s6 + $0xa0] sm:$0xff]
    %v1268 = vld [vmem:[%s6 + $0xa8] sm:$0xff]
    %v1269 = vld [vmem:[%s6 + $0xb0] sm:$0xff]
    %v1270 = vld [vmem:[%s6 + $0xb8] sm:$0xff]
    %v1271 = vld [vmem:[%s6 + $0xc0] sm:$0xff]
    %v1272 = vld [vmem:[%s6 + $0xc8] sm:$0xff]
    %v1273 = vld [vmem:[%s6 + $0xd0] sm:$0xff]
    %v1274 = vld [vmem:[%s6 + $0xd8] sm:$0xff]
    %v1275 = vld [vmem:[%s6 + $0xe0] sm:$0xff]
    %v1276 = vld [vmem:[%s6 + $0xe8] sm:$0xff]
    %v1277 = vld [vmem:[%s6 + $0xf0] sm:$0xff]
    %v1278 = vld [vmem:[%s6 + $0xf8] sm:$0xff]
    %v1279 = vld [vmem:[%s6 + $0x100] sm:$0xff]
    %v1280 = vld [vmem:[%s6 + $0x108] sm:$0xff]
    %v1281 = vld [vmem:[%s6 + $0x110] sm:$0xff]
    %v1282 = vld [vmem:[%s6 + $0x118] sm:$0xff]
    %v1283 = vld [vmem:[%s6 + $0x120] sm:$0xff]
    %v1284 = vld [vmem:[%s6 + $0x128] sm:$0xff]
    %v1285 = vld [vmem:[%s6 + $0x130] sm:$0xff]
    %v1286 = vld [vmem:[%s6 + $0x138] sm:$0xff]
    %v1287 = vld [vmem:[%s6 + $0x140] sm:$0xff]
    %v1288 = vld [vmem:[%s6 + $0x148] sm:$0xff]
    %v1289 = vld [vmem:[%s6 + $0x150] sm:$0xff]
    %v1290 = vld [vmem:[%s6 + $0x158] sm:$0xff]
    %v1291 = vld [vmem:[%s6 + $0x160] sm:$0xff]
    %v1292 = vld [vmem:[%s6 + $0x168] sm:$0xff]
    %v1293 = vld [vmem:[%s6 + $0x170] sm:$0xff]
    %v1294 = vld [vmem:[%s6 + $0x178] sm:$0xff]
    %v1295 = vld [vmem:[%s6 + $0x180] sm:$0xff]
    %v1296 = vld [vmem:[%s6 + $0x188] sm:$0xff]
    %v1297 = vld [vmem:[%s6 + $0x190] sm:$0xff]
    %v1298 = vld [vmem:[%s6 + $0x198] sm:$0xff]
    %v1299 = vld [vmem:[%s6 + $0x1a0] sm:$0xff]
    %v1300 = vld [vmem:[%s6 + $0x1a8] sm:$0xff]
    %v1301 = vld [vmem:[%s6 + $0x1b0] sm:$0xff]
    %v1302 = vld [vmem:[%s6 + $0x1b8] sm:$0xff]
    %v1303 = vld [vmem:[%s6 + $0x1c0] sm:$0xff]
    %v1304 = vld [vmem:[%s6 + $0x1c8] sm:$0xff]
    %v1305 = vld [vmem:[%s6 + $0x1d0] sm:$0xff]
    %v1306 = vld [vmem:[%s6 + $0x1d8] sm:$0xff]
    %v1307 = vld [vmem:[%s6 + $0x1e0] sm:$0xff]
    %v1308 = vld [vmem:[%s6 + $0x1e8] sm:$0xff]
    %v1309 = vld [vmem:[%s6 + $0x1f0] sm:$0xff]
    %v1310 = vld [vmem:[%s6 + $0x1f8] sm:$0xff]
    %1311 = vmatprep.subr.mxu0 0.0
    %1312 = vmatpush1.msra.mxu0 %v1262
    %1313 = vmatprep.subr.mxu0 0.0
    %1314 = vmatpush1.msra.mxu0 %v1261
    %1315 = vmatprep.subr.mxu0 0.0
    %1316 = vmatpush1.msra.mxu0 %v1260
    %1317 = vmatprep.subr.mxu0 0.0
    %1318 = vmatpush1.msra.mxu0 %v1259
    %1319 = vmatprep.subr.mxu0 0.0
    %1320 = vmatpush1.msra.mxu0 %v1258
    %1321 = vmatprep.subr.mxu0 0.0
    %1322 = vmatpush1.msra.mxu0 %v1257
    %1323 = vmatprep.subr.mxu0 0.0
    %1324 = vmatpush1.msra.mxu0 %v1256
    %1325 = vmatprep.subr.mxu0 0.0
    %1326 = vmatpush1.msra.mxu0 %v1255
    %1327 = vmatprep.subr.mxu0 0.0
    %1328 = vmatpush1.msra.mxu0 %v1254
    %1329 = vmatprep.subr.mxu0 0.0
    %1330 = vmatpush1.msra.mxu0 %v1253
    %1331 = vmatprep.subr.mxu0 0.0
    %1332 = vmatpush1.msra.mxu0 %v1252
    %1333 = vmatprep.subr.mxu0 0.0
    %1334 = vmatpush1.msra.mxu0 %v1251
    %1335 = vmatprep.subr.mxu0 0.0
    %1336 = vmatpush1.msra.mxu0 %v1250
    %1337 = vmatprep.subr.mxu0 0.0
    %1338 = vmatpush1.msra.mxu0 %v1249
    %1339 = vmatprep.subr.mxu0 0.0
    %1340 = vmatpush1.msra.mxu0 %v1248
    %1341 = vmatprep.subr.mxu0 0.0
    %1342 = vmatpush1.msra.mxu0 %v1247
    %1343 = vmatprep.subr.mxu0 0.0
    %1344 = vmatpush2.msra.mxu0 %v1278
    %1345 = vmatprep.subr.mxu0 0.0
    %1346 = vmatpush2.msra.mxu0 %v1277
    %1347 = vmatprep.subr.mxu0 0.0
    %1348 = vmatpush2.msra.mxu0 %v1276
    %1349 = vmatprep.subr.mxu0 0.0
    %1350 = vmatpush2.msra.mxu0 %v1275
    %1351 = vmatprep.subr.mxu0 0.0
    %1352 = vmatpush2.msra.mxu0 %v1274
    %1353 = vmatprep.subr.mxu0 0.0
    %1354 = vmatpush2.msra.mxu0 %v1273
    %1355 = vmatprep.subr.mxu0 0.0
    %1356 = vmatpush2.msra.mxu0 %v1272
    %1357 = vmatprep.subr.mxu0 0.0
    %1358 = vmatpush2.msra.mxu0 %v1271
    %1359 = vmatprep.subr.mxu0 0.0
    %1360 = vmatpush2.msra.mxu0 %v1270
    %1361 = vmatprep.subr.mxu0 0.0
    %1362 = vmatpush2.msra.mxu0 %v1269
    %1363 = vmatprep.subr.mxu0 0.0
    %1364 = vmatpush2.msra.mxu0 %v1268
    %1365 = vmatprep.subr.mxu0 0.0
    %1366 = vmatpush2.msra.mxu0 %v1267
    %1367 = vmatprep.subr.mxu0 0.0
    %1368 = vmatpush2.msra.mxu0 %v1266
    %1369 = vmatprep.subr.mxu0 0.0
    %1370 = vmatpush2.msra.mxu0 %v1265
    %1371 = vmatprep.subr.mxu0 0.0
    %1372 = vmatpush2.msra.mxu0 %v1264
    %1373 = vmatprep.subr.mxu0 0.0
    %1374 = vmatpush2.msra.mxu0 %v1263
    %1375 = vmatprep.mubr.f32.mxu0 %v1232
    %1376 = vmatmul.mubr.f32.gmra.mxu0 %v1231
    %v1377 = vpop.f32.mrf.mxu0
    %v1378 = vadd.f32 0.0, %v1377
    %v1379 = vpop.f32.mrf.mxu0
    %1380 = vmatprep.mubr.f32.mxu0 %v1236
    %1381 = vmatmul.mubr.f32.gmra.mxu0 %v1235
    %v1382 = vpop.f32.mrf.mxu0
    %v1383 = vadd.f32 0.0, %v1382
    %v1384 = vpop.f32.mrf.mxu0
    %1385 = vmatprep.mubr.f32.mxu0 %v1240
    %1386 = vmatmul.mubr.f32.gmra.mxu0 %v1239
    %v1387 = vpop.f32.mrf.mxu0
    %v1388 = vadd.f32 0.0, %v1387
    %v1389 = vpop.f32.mrf.mxu0
    %1390 = vmatprep.mubr.f32.mxu0 %v1244
    %1391 = vmatmul.mubr.f32.gmra.mxu0 %v1243
    %v1392 = vpop.f32.mrf.mxu0
    %v1393 = vadd.f32 0.0, %v1392
    %v1394 = vpop.f32.mrf.mxu0
    %1395 = vdwg.mxu0
    %1396 = vmatprep.subr.mxu0 0.0
    %1397 = vmatpush1.msra.mxu0 %v1294
    %1398 = vmatprep.subr.mxu0 0.0
    %1399 = vmatpush1.msra.mxu0 %v1293
    %1400 = vmatprep.subr.mxu0 0.0
    %1401 = vmatpush1.msra.mxu0 %v1292
    %1402 = vmatprep.subr.mxu0 0.0
    %1403 = vmatpush1.msra.mxu0 %v1291
    %1404 = vmatprep.subr.mxu0 0.0
    %1405 = vmatpush1.msra.mxu0 %v1290
    %1406 = vmatprep.subr.mxu0 0.0
    %1407 = vmatpush1.msra.mxu0 %v1289
    %1408 = vmatprep.subr.mxu0 0.0
    %1409 = vmatpush1.msra.mxu0 %v1288
    %1410 = vmatprep.subr.mxu0 0.0
    %1411 = vmatpush1.msra.mxu0 %v1287
    %1412 = vmatprep.subr.mxu0 0.0
    %1413 = vmatpush1.msra.mxu0 %v1286
    %1414 = vmatprep.subr.mxu0 0.0
    %1415 = vmatpush1.msra.mxu0 %v1285
    %1416 = vmatprep.subr.mxu0 0.0
    %1417 = vmatpush1.msra.mxu0 %v1284
    %1418 = vmatprep.subr.mxu0 0.0
    %1419 = vmatpush1.msra.mxu0 %v1283
    %1420 = vmatprep.subr.mxu0 0.0
    %1421 = vmatpush1.msra.mxu0 %v1282
    %1422 = vmatprep.subr.mxu0 0.0
    %1423 = vmatpush1.msra.mxu0 %v1281
    %1424 = vmatprep.subr.mxu0 0.0
    %1425 = vmatpush1.msra.mxu0 %v1280
    %1426 = vmatprep.subr.mxu0 0.0
    %1427 = vmatpush1.msra.mxu0 %v1279
    %1428 = vmatprep.subr.mxu0 0.0
    %1429 = vmatpush2.msra.mxu0 %v1310
    %1430 = vmatprep.subr.mxu0 0.0
    %1431 = vmatpush2.msra.mxu0 %v1309
    %1432 = vmatprep.subr.mxu0 0.0
    %1433 = vmatpush2.msra.mxu0 %v1308
    %1434 = vmatprep.subr.mxu0 0.0
    %1435 = vmatpush2.msra.mxu0 %v1307
    %1436 = vmatprep.subr.mxu0 0.0
    %1437 = vmatpush2.msra.mxu0 %v1306
    %1438 = vmatprep.subr.mxu0 0.0
    %1439 = vmatpush2.msra.mxu0 %v1305
    %1440 = vmatprep.subr.mxu0 0.0
    %1441 = vmatpush2.msra.mxu0 %v1304
    %1442 = vmatprep.subr.mxu0 0.0
    %1443 = vmatpush2.msra.mxu0 %v1303
    %1444 = vmatprep.subr.mxu0 0.0
    %1445 = vmatpush2.msra.mxu0 %v1302
    %1446 = vmatprep.subr.mxu0 0.0
    %1447 = vmatpush2.msra.mxu0 %v1301
    %1448 = vmatprep.subr.mxu0 0.0
    %1449 = vmatpush2.msra.mxu0 %v1300
    %1450 = vmatprep.subr.mxu0 0.0
    %1451 = vmatpush2.msra.mxu0 %v1299
    %1452 = vmatprep.subr.mxu0 0.0
    %1453 = vmatpush2.msra.mxu0 %v1298
    %1454 = vmatprep.subr.mxu0 0.0
    %1455 = vmatpush2.msra.mxu0 %v1297
    %1456 = vmatprep.subr.mxu0 0.0
    %1457 = vmatpush2.msra.mxu0 %v1296
    %1458 = vmatprep.subr.mxu0 0.0
    %1459 = vmatpush2.msra.mxu0 %v1295
    %1460 = vmatprep.mubr.f32.mxu0 %v1234
    %1461 = vmatmul.mubr.f32.gmra.mxu0 %v1233
    %v1462 = vpop.f32.mrf.mxu0
    %v1463 = vadd.f32 %v1378, %v1462
    %v1464 = vpop.f32.mrf.mxu0
    %1465 = vmatprep.mubr.f32.mxu0 %v1238
    %1466 = vmatmul.mubr.f32.gmra.mxu0 %v1237
    %v1467 = vpop.f32.mrf.mxu0
    %v1468 = vadd.f32 %v1383, %v1467
    %v1469 = vpop.f32.mrf.mxu0
    %1470 = vmatprep.mubr.f32.mxu0 %v1242
    %1471 = vmatmul.mubr.f32.gmra.mxu0 %v1241
    %v1472 = vpop.f32.mrf.mxu0
    %v1473 = vadd.f32 %v1388, %v1472
    %v1474 = vpop.f32.mrf.mxu0
    %1475 = vmatprep.mubr.f32.mxu0 %v1246
    %1476 = vmatmul.mubr.f32.gmra.mxu0 %v1245
    %v1477 = vpop.f32.mrf.mxu0
    %v1478 = vadd.f32 %v1393, %v1477
    %v1479 = vpop.f32.mrf.mxu0
    %1480 = vdwg.mxu0
    %v1481 = vsub.f32 %v1463, %v805
    %v1482 = vsub.f32 %v1468, %v806
    %v1483 = vsub.f32 %v1473, %v807
    %v1484 = vsub.f32 %v1478, %v808
    %v1485 = vmul.f32 %v1481, %v1481
    %v1486 = vmul.f32 %v1482, %v1482
    %v1487 = vmul.f32 %v1483, %v1483
    %v1488 = vmul.f32 %v1484, %v1484
    %v1489 = vsel %vm817, %v1485, 0.0
    %1490 = vadd.xlane.f32.xlu0 %v1489
    %v1491 = vpop.xlane.xlu0 %1490
    %v1492 = vsel %vm817, %v1486, 0.0
    %1493 = vadd.xlane.f32.xlu0 %v1492
    %v1494 = vpop.xlane.xlu0 %1493
    %v1495 = vsel %vm817, %v1487, 0.0
    %1496 = vadd.xlane.f32.xlu0 %v1495
    %v1497 = vpop.xlane.xlu0 %1496
    %v1498 = vsel %vm817, %v1488, 0.0
    %1499 = vadd.xlane.f32.xlu0 %v1498
    %v1500 = vpop.xlane.xlu0 %1499
    %v1501 = vadd.f32 %v1231, %v1235
    %v1502 = vadd.f32 %v1501, %v1239
    %v1503 = vadd.f32 %v1502, %v1243
    %v1504 = vrot.slane %v1503, 4
    %v1505 = vadd.f32 %v1503, %v1504
    %v1506 = vrot.slane %v1505, 2
    %v1507 = vadd.f32 %v1505, %v1506
    %v1508 = vrot.slane %v1507, 1
    %v1509 = vadd.f32 %v1507, %v1508
    %v1510 = vadd.f32 %v1232, %v1236
    %v1511 = vadd.f32 %v1510, %v1240
    %v1512 = vadd.f32 %v1511, %v1244
    %v1513 = vrot.slane %v1512, 4
    %v1514 = vadd.f32 %v1512, %v1513
    %v1515 = vrot.slane %v1514, 2
    %v1516 = vadd.f32 %v1514, %v1515
    %v1517 = vrot.slane %v1516, 1
    %v1518 = vadd.f32 %v1516, %v1517
    %v1519 = vadd.f32 %v1233, %v1237
    %v1520 = vadd.f32 %v1519, %v1241
    %v1521 = vadd.f32 %v1520, %v1245
    %v1522 = vrot.slane %v1521, 4
    %v1523 = vadd.f32 %v1521, %v1522
    %v1524 = vrot.slane %v1523, 2
    %v1525 = vadd.f32 %v1523, %v1524
    %v1526 = vrot.slane %v1525, 1
    %v1527 = vadd.f32 %v1525, %v1526
    %v1528 = vadd.f32 %v1234, %v1238
    %v1529 = vadd.f32 %v1528, %v1242
    %v1530 = vadd.f32 %v1529, %v1246
    %v1531 = vrot.slane %v1530, 4
    %v1532 = vadd.f32 %v1530, %v1531
    %v1533 = vrot.slane %v1532, 2
    %v1534 = vadd.f32 %v1532, %v1533
    %v1535 = vrot.slane %v1534, 1
    %v1536 = vadd.f32 %v1534, %v1535
    %v1541 = vcombine.low %v1509, %v1518
    %v1542 = vcombine.low %v1527, %v1536
    %v1544 = vunpack.c.l.s4 1966171168
    %v1545 = vunpack.c.0.s8 %v1544
    %v1546 = vlaneseq
    %v1547 = vshrl.u32 %v1546, 7
    %v1548 = vsub.s32 %v1545, %v1547
    %v1549 = vrot.slane %v1541, %v1548
    %v1551 = vunpack.c.l.s4 1966171168
    %v1552 = vunpack.c.0.s8 %v1551
    %v1553 = vlaneseq
    %v1554 = vshrl.u32 %v1553, 7
    %v1555 = vsub.s32 %v1552, %v1554
    %v1556 = vrot.slane %v1542, %v1555
    %v1557 = vcombine.low %v1549, %v1556
    %v1559 = vunpack.c.l.s4 1966171168
    %v1560 = vunpack.c.0.s8 %v1559
    %v1561 = vlaneseq
    %v1562 = vshrl.u32 %v1561, 7
    %v1563 = vsub.s32 %v1560, %v1562
    %v1564 = vrot.slane %v1557, %v1563
    %v1566 = vlaneseq
    %vm1567 = vcmp.ge.s32.totalorder %v1566, 0
    %vm1568 = vcmp.lt.s32.totalorder %v1566, 512
    %vm1569 = vmand %vm1567, %vm1568
    %1570 = vst.msk [vmem:[%s15] sm:$0xf] %vm1569, %v1564
    %v1571 = vadd.f32 %v1491, %v1494
    %v1572 = vadd.f32 %v1571, %v1497
    %v1573 = vadd.f32 %v1572, %v1500
    %v1574 = vrot.slane %v1573, 4
    %v1575 = vadd.f32 %v1573, %v1574
    %v1576 = vrot.slane %v1575, 2
    %v1577 = vadd.f32 %v1575, %v1576
    %v1578 = vrot.slane %v1577, 1
    %v1579 = vadd.f32 %v1577, %v1578
    %vm1580 = vcmask 0
    %1581 = vst.msk [vmem:[#allocation2] sm:$0x1] %vm1580, %v1579
    %vm1582 = vcmask 7168
    %1583 = vst.msk [vmem:[%s13] sm:$0xff] %vm1582, %v1138
    %1584 = vst.msk [vmem:[%s13 + $0x8] sm:$0xff] %vm1582, %v1158
    %1585 = vst.msk [vmem:[%s13 + $0x10] sm:$0xff] %vm1582, %v1178
    %1586 = vst.msk [vmem:[%s13 + $0x18] sm:$0xff] %vm1582, %v1198
    %1587 = vst.msk [vmem:[%s14] sm:$0xff] %vm817, %v1463
    %1588 = vst.msk [vmem:[%s14 + $0x8] sm:$0xff] %vm817, %v1468
    %1589 = vst.msk [vmem:[%s14 + $0x10] sm:$0xff] %vm817, %v1473
    %1590 = vst.msk [vmem:[%s14 + $0x18] sm:$0xff] %vm817, %v1478
    %v1591 = vrot.slane %v1463, 7
    %v1592 = vrot.slane %v1468, 7
    %v1593 = vrot.slane %v1473, 7
    %v1594 = vrot.slane %v1478, 7
    %v1595 = vsel %vm112, %v1593, %v1594
    %v1596 = vsel %vm112, %v1592, %v1593
    %v1597 = vsel %vm112, %v1591, %v1592
    %v1598 = vsel %vm112, %v1594, %v1591
    %v1599 = vsel %vm104, 0.0, %v1598
    %v1600 = vsel %vm105, 0.0, %v1597
    %v1601 = vsel %vm106, 0.0, %v1596
    %v1602 = vsel %vm107, 0.0, %v1595
    %v1603 = vrot.slane %v1463, 1
    %v1604 = vrot.slane %v1468, 1
    %v1605 = vrot.slane %v1473, 1
    %v1606 = vrot.slane %v1478, 1
    %v1607 = vsel %vm129, %v1605, %v1606
    %v1608 = vsel %vm129, %v1604, %v1605
    %v1609 = vsel %vm129, %v1603, %v1604
    %v1610 = vsel %vm129, %v1606, %v1603
    %v1611 = vsel %vm121, 0.0, %v1609
    %v1612 = vsel %vm122, 0.0, %v1608
    %v1613 = vsel %vm123, 0.0, %v1607
    %v1614 = vsel %vm124, 0.0, %v1610
    %v1615 = vld [vmem:[%s8] sm:$0xff]
    %v1616 = vld [vmem:[%s8 + $0x8] sm:$0xff]
    %s1617 = scalar_lea.vmem %s8, 16
    %v1618 = vld [vmem:[%s1617] sm:$0xff]
    %v1619 = vld [vmem:[%s1617 + $0x8] sm:$0xff]
    %v1621 = vsel %vm817, %v1463, 0
    %v1624 = vsel %vm817, %v1468, 0
    %v1627 = vsel %vm817, %v1473, 0
    %v1630 = vsel %vm817, %v1478, 0
    %1632 = vmatprep.subr.mxu0 0.0
    %1633 = vmatpush1.msra.mxu0 0.0
    %1634 = vmatprep.subr.mxu0 0.0
    %1635 = vmatpush1.msra.mxu0 0.0
    %1636 = vmatprep.subr.mxu0 0.0
    %1637 = vmatpush1.msra.mxu0 0.0
    %1638 = vmatprep.subr.mxu0 0.0
    %1639 = vmatpush1.msra.mxu0 0.0
    %1640 = vmatprep.subr.mxu0 0.0
    %1641 = vmatpush1.msra.mxu0 0.0
    %1642 = vmatprep.subr.mxu0 0.0
    %1643 = vmatpush1.msra.mxu0 0.0
    %1644 = vmatprep.subr.mxu0 0.0
    %1645 = vmatpush1.msra.mxu0 0.0
    %1646 = vmatprep.subr.mxu0 0.0
    %1647 = vmatpush1.msra.mxu0 0.0
    %1648 = vmatprep.subr.mxu0 0.0
    %1649 = vmatpush1.msra.mxu0 0.0
    %1650 = vmatprep.subr.mxu0 0.0
    %1651 = vmatpush1.msra.mxu0 0.0
    %1652 = vmatprep.subr.mxu0 0.0
    %1653 = vmatpush1.msra.mxu0 0.0
    %1654 = vmatprep.subr.mxu0 0.0
    %1655 = vmatpush1.msra.mxu0 0.0
    %1656 = vmatprep.subr.mxu0 0.0
    %1657 = vmatpush1.msra.mxu0 0.0
    %1658 = vmatprep.subr.mxu0 0.0
    %1659 = vmatpush1.msra.mxu0 0.0
    %1660 = vmatprep.subr.mxu0 0.0
    %1661 = vmatpush1.msra.mxu0 %v1619
    %1662 = vmatprep.subr.mxu0 0.0
    %1663 = vmatpush1.msra.mxu0 %v1618
    %1664 = vmatprep.subr.mxu0 0.0
    %1665 = vmatpush2.msra.mxu0 0.0
    %1666 = vmatprep.subr.mxu0 0.0
    %1667 = vmatpush2.msra.mxu0 0.0
    %1668 = vmatprep.subr.mxu0 0.0
    %1669 = vmatpush2.msra.mxu0 0.0
    %1670 = vmatprep.subr.mxu0 0.0
    %1671 = vmatpush2.msra.mxu0 0.0
    %1672 = vmatprep.subr.mxu0 0.0
    %1673 = vmatpush2.msra.mxu0 0.0
    %1674 = vmatprep.subr.mxu0 0.0
    %1675 = vmatpush2.msra.mxu0 0.0
    %1676 = vmatprep.subr.mxu0 0.0
    %1677 = vmatpush2.msra.mxu0 0.0
    %1678 = vmatprep.subr.mxu0 0.0
    %1679 = vmatpush2.msra.mxu0 0.0
    %1680 = vmatprep.subr.mxu0 0.0
    %1681 = vmatpush2.msra.mxu0 0.0
    %1682 = vmatprep.subr.mxu0 0.0
    %1683 = vmatpush2.msra.mxu0 0.0
    %1684 = vmatprep.subr.mxu0 0.0
    %1685 = vmatpush2.msra.mxu0 0.0
    %1686 = vmatprep.subr.mxu0 0.0
    %1687 = vmatpush2.msra.mxu0 0.0
    %1688 = vmatprep.subr.mxu0 0.0
    %1689 = vmatpush2.msra.mxu0 0.0
    %1690 = vmatprep.subr.mxu0 0.0
    %1691 = vmatpush2.msra.mxu0 0.0
    %1692 = vmatprep.subr.mxu0 0.0
    %1693 = vmatpush2.msra.mxu0 0.0
    %1694 = vmatprep.subr.mxu0 0.0
    %1695 = vmatpush2.msra.mxu0 0.0
    %1696 = vmatprep.mubr.f32.mxu0 0.0
    %1697 = vmatmul.mubr.f32.gmra.mxu0 %v1621
    %v1698 = vpop.f32.mrf.mxu0
    %v1699 = vadd.f32 0.0, %v1698
    %v1700 = vpop.f32.mrf.mxu0
    %1701 = vmatprep.mubr.f32.mxu0 0.0
    %1702 = vmatmul.mubr.f32.gmra.mxu0 %v1624
    %v1703 = vpop.f32.mrf.mxu0
    %v1704 = vadd.f32 0.0, %v1703
    %v1705 = vpop.f32.mrf.mxu0
    %1706 = vmatprep.mubr.f32.mxu0 0.0
    %1707 = vmatmul.mubr.f32.gmra.mxu0 %v1627
    %v1708 = vpop.f32.mrf.mxu0
    %v1709 = vadd.f32 0.0, %v1708
    %v1710 = vpop.f32.mrf.mxu0
    %1711 = vmatprep.mubr.f32.mxu0 0.0
    %1712 = vmatmul.mubr.f32.gmra.mxu0 %v1630
    %v1713 = vpop.f32.mrf.mxu0
    %v1714 = vadd.f32 0.0, %v1713
    %v1715 = vpop.f32.mrf.mxu0
    %1716 = vdwg.mxu0
    %v1718 = vsel %vm817, %v1599, 0
    %v1721 = vsel %vm817, %v1600, 0
    %v1724 = vsel %vm817, %v1601, 0
    %v1727 = vsel %vm817, %v1602, 0
    %1729 = vmatprep.subr.mxu0 0.0
    %1730 = vmatpush1.msra.mxu0 0.0
    %1731 = vmatprep.subr.mxu0 0.0
    %1732 = vmatpush1.msra.mxu0 0.0
    %1733 = vmatprep.subr.mxu0 0.0
    %1734 = vmatpush1.msra.mxu0 0.0
    %1735 = vmatprep.subr.mxu0 0.0
    %1736 = vmatpush1.msra.mxu0 0.0
    %1737 = vmatprep.subr.mxu0 0.0
    %1738 = vmatpush1.msra.mxu0 0.0
    %1739 = vmatprep.subr.mxu0 0.0
    %1740 = vmatpush1.msra.mxu0 0.0
    %1741 = vmatprep.subr.mxu0 0.0
    %1742 = vmatpush1.msra.mxu0 0.0
    %1743 = vmatprep.subr.mxu0 0.0
    %1744 = vmatpush1.msra.mxu0 0.0
    %1745 = vmatprep.subr.mxu0 0.0
    %1746 = vmatpush1.msra.mxu0 0.0
    %1747 = vmatprep.subr.mxu0 0.0
    %1748 = vmatpush1.msra.mxu0 0.0
    %1749 = vmatprep.subr.mxu0 0.0
    %1750 = vmatpush1.msra.mxu0 0.0
    %1751 = vmatprep.subr.mxu0 0.0
    %1752 = vmatpush1.msra.mxu0 0.0
    %1753 = vmatprep.subr.mxu0 0.0
    %1754 = vmatpush1.msra.mxu0 0.0
    %1755 = vmatprep.subr.mxu0 0.0
    %1756 = vmatpush1.msra.mxu0 0.0
    %1757 = vmatprep.subr.mxu0 0.0
    %1758 = vmatpush1.msra.mxu0 %v1616
    %1759 = vmatprep.subr.mxu0 0.0
    %1760 = vmatpush1.msra.mxu0 %v1615
    %1761 = vmatprep.subr.mxu0 0.0
    %1762 = vmatpush2.msra.mxu0 0.0
    %1763 = vmatprep.subr.mxu0 0.0
    %1764 = vmatpush2.msra.mxu0 0.0
    %1765 = vmatprep.subr.mxu0 0.0
    %1766 = vmatpush2.msra.mxu0 0.0
    %1767 = vmatprep.subr.mxu0 0.0
    %1768 = vmatpush2.msra.mxu0 0.0
    %1769 = vmatprep.subr.mxu0 0.0
    %1770 = vmatpush2.msra.mxu0 0.0
    %1771 = vmatprep.subr.mxu0 0.0
    %1772 = vmatpush2.msra.mxu0 0.0
    %1773 = vmatprep.subr.mxu0 0.0
    %1774 = vmatpush2.msra.mxu0 0.0
    %1775 = vmatprep.subr.mxu0 0.0
    %1776 = vmatpush2.msra.mxu0 0.0
    %1777 = vmatprep.subr.mxu0 0.0
    %1778 = vmatpush2.msra.mxu0 0.0
    %1779 = vmatprep.subr.mxu0 0.0
    %1780 = vmatpush2.msra.mxu0 0.0
    %1781 = vmatprep.subr.mxu0 0.0
    %1782 = vmatpush2.msra.mxu0 0.0
    %1783 = vmatprep.subr.mxu0 0.0
    %1784 = vmatpush2.msra.mxu0 0.0
    %1785 = vmatprep.subr.mxu0 0.0
    %1786 = vmatpush2.msra.mxu0 0.0
    %1787 = vmatprep.subr.mxu0 0.0
    %1788 = vmatpush2.msra.mxu0 0.0
    %1789 = vmatprep.subr.mxu0 0.0
    %1790 = vmatpush2.msra.mxu0 0.0
    %1791 = vmatprep.subr.mxu0 0.0
    %1792 = vmatpush2.msra.mxu0 0.0
    %1793 = vmatprep.mubr.f32.mxu0 0.0
    %1794 = vmatmul.mubr.f32.gmra.mxu0 %v1718
    %v1795 = vpop.f32.mrf.mxu0
    %v1796 = vadd.f32 %v1699, %v1795
    %v1797 = vpop.f32.mrf.mxu0
    %1798 = vmatprep.mubr.f32.mxu0 0.0
    %1799 = vmatmul.mubr.f32.gmra.mxu0 %v1721
    %v1800 = vpop.f32.mrf.mxu0
    %v1801 = vadd.f32 %v1704, %v1800
    %v1802 = vpop.f32.mrf.mxu0
    %1803 = vmatprep.mubr.f32.mxu0 0.0
    %1804 = vmatmul.mubr.f32.gmra.mxu0 %v1724
    %v1805 = vpop.f32.mrf.mxu0
    %v1806 = vadd.f32 %v1709, %v1805
    %v1807 = vpop.f32.mrf.mxu0
    %1808 = vmatprep.mubr.f32.mxu0 0.0
    %1809 = vmatmul.mubr.f32.gmra.mxu0 %v1727
    %v1810 = vpop.f32.mrf.mxu0
    %v1811 = vadd.f32 %v1714, %v1810
    %v1812 = vpop.f32.mrf.mxu0
    %1813 = vdwg.mxu0
    %s1814 = scalar_lea.vmem %s8, 32
    %v1815 = vld [vmem:[%s1814] sm:$0xff]
    %v1816 = vld [vmem:[%s1814 + $0x8] sm:$0xff]
    %v1818 = vsel %vm817, %v1611, 0
    %v1821 = vsel %vm817, %v1612, 0
    %v1824 = vsel %vm817, %v1613, 0
    %v1827 = vsel %vm817, %v1614, 0
    %1829 = vmatprep.subr.mxu0 0.0
    %1830 = vmatpush1.msra.mxu0 0.0
    %1831 = vmatprep.subr.mxu0 0.0
    %1832 = vmatpush1.msra.mxu0 0.0
    %1833 = vmatprep.subr.mxu0 0.0
    %1834 = vmatpush1.msra.mxu0 0.0
    %1835 = vmatprep.subr.mxu0 0.0
    %1836 = vmatpush1.msra.mxu0 0.0
    %1837 = vmatprep.subr.mxu0 0.0
    %1838 = vmatpush1.msra.mxu0 0.0
    %1839 = vmatprep.subr.mxu0 0.0
    %1840 = vmatpush1.msra.mxu0 0.0
    %1841 = vmatprep.subr.mxu0 0.0
    %1842 = vmatpush1.msra.mxu0 0.0
    %1843 = vmatprep.subr.mxu0 0.0
    %1844 = vmatpush1.msra.mxu0 0.0
    %1845 = vmatprep.subr.mxu0 0.0
    %1846 = vmatpush1.msra.mxu0 0.0
    %1847 = vmatprep.subr.mxu0 0.0
    %1848 = vmatpush1.msra.mxu0 0.0
    %1849 = vmatprep.subr.mxu0 0.0
    %1850 = vmatpush1.msra.mxu0 0.0
    %1851 = vmatprep.subr.mxu0 0.0
    %1852 = vmatpush1.msra.mxu0 0.0
    %1853 = vmatprep.subr.mxu0 0.0
    %1854 = vmatpush1.msra.mxu0 0.0
    %1855 = vmatprep.subr.mxu0 0.0
    %1856 = vmatpush1.msra.mxu0 0.0
    %1857 = vmatprep.subr.mxu0 0.0
    %1858 = vmatpush1.msra.mxu0 %v1816
    %1859 = vmatprep.subr.mxu0 0.0
    %1860 = vmatpush1.msra.mxu0 %v1815
    %1861 = vmatprep.subr.mxu0 0.0
    %1862 = vmatpush2.msra.mxu0 0.0
    %1863 = vmatprep.subr.mxu0 0.0
    %1864 = vmatpush2.msra.mxu0 0.0
    %1865 = vmatprep.subr.mxu0 0.0
    %1866 = vmatpush2.msra.mxu0 0.0
    %1867 = vmatprep.subr.mxu0 0.0
    %1868 = vmatpush2.msra.mxu0 0.0
    %1869 = vmatprep.subr.mxu0 0.0
    %1870 = vmatpush2.msra.mxu0 0.0
    %1871 = vmatprep.subr.mxu0 0.0
    %1872 = vmatpush2.msra.mxu0 0.0
    %1873 = vmatprep.subr.mxu0 0.0
    %1874 = vmatpush2.msra.mxu0 0.0
    %1875 = vmatprep.subr.mxu0 0.0
    %1876 = vmatpush2.msra.mxu0 0.0
    %1877 = vmatprep.subr.mxu0 0.0
    %1878 = vmatpush2.msra.mxu0 0.0
    %1879 = vmatprep.subr.mxu0 0.0
    %1880 = vmatpush2.msra.mxu0 0.0
    %1881 = vmatprep.subr.mxu0 0.0
    %1882 = vmatpush2.msra.mxu0 0.0
    %1883 = vmatprep.subr.mxu0 0.0
    %1884 = vmatpush2.msra.mxu0 0.0
    %1885 = vmatprep.subr.mxu0 0.0
    %1886 = vmatpush2.msra.mxu0 0.0
    %1887 = vmatprep.subr.mxu0 0.0
    %1888 = vmatpush2.msra.mxu0 0.0
    %1889 = vmatprep.subr.mxu0 0.0
    %1890 = vmatpush2.msra.mxu0 0.0
    %1891 = vmatprep.subr.mxu0 0.0
    %1892 = vmatpush2.msra.mxu0 0.0
    %1893 = vmatprep.mubr.f32.mxu0 0.0
    %1894 = vmatmul.mubr.f32.gmra.mxu0 %v1818
    %v1895 = vpop.f32.mrf.mxu0
    %v1896 = vadd.f32 0.0, %v1895
    %v1897 = vpop.f32.mrf.mxu0
    %1898 = vmatprep.mubr.f32.mxu0 0.0
    %1899 = vmatmul.mubr.f32.gmra.mxu0 %v1821
    %v1900 = vpop.f32.mrf.mxu0
    %v1901 = vadd.f32 0.0, %v1900
    %v1902 = vpop.f32.mrf.mxu0
    %1903 = vmatprep.mubr.f32.mxu0 0.0
    %1904 = vmatmul.mubr.f32.gmra.mxu0 %v1824
    %v1905 = vpop.f32.mrf.mxu0
    %v1906 = vadd.f32 0.0, %v1905
    %v1907 = vpop.f32.mrf.mxu0
    %1908 = vmatprep.mubr.f32.mxu0 0.0
    %1909 = vmatmul.mubr.f32.gmra.mxu0 %v1827
    %v1910 = vpop.f32.mrf.mxu0
    %v1911 = vadd.f32 0.0, %v1910
    %v1912 = vpop.f32.mrf.mxu0
    %1913 = vdwg.mxu0
    %v1914 = vadd.f32 %v1796, %v1896
    %v1915 = vadd.f32 %v1801, %v1901
    %v1916 = vadd.f32 %v1806, %v1906
    %v1917 = vadd.f32 %v1811, %v1911
    %v1918 = vld [vmem:[%s9] sm:$0x1]
    %v1920 = vlaneseq
    %v1921 = vshrl.u32 %v1920, 7
    %v1922 = vsub.s32 0, %v1921
    %v1923 = vrot.slane %v1918, %v1922
    %v1925 = vadd.f32 %v1914, %v1923
    %v1926 = vadd.f32 %v1915, %v1923
    %v1927 = vadd.f32 %v1916, %v1923
    %v1928 = vadd.f32 %v1917, %v1923
    %v1929 = vmax.f32 %v1925, 0.0
    %v1930 = vmax.f32 %v1926, 0.0
    %v1931 = vmax.f32 %v1927, 0.0
    %v1932 = vmax.f32 %v1928, 0.0
    %v1933 = vrot.slane %v1929, 7
    %v1934 = vrot.slane %v1930, 7
    %v1935 = vrot.slane %v1931, 7
    %v1936 = vrot.slane %v1932, 7
    %v1937 = vsel %vm112, %v1935, %v1936
    %v1938 = vsel %vm112, %v1934, %v1935
    %v1939 = vsel %vm112, %v1933, %v1934
    %v1940 = vsel %vm112, %v1936, %v1933
    %v1941 = vsel %vm104, 0.0, %v1940
    %v1942 = vsel %vm105, 0.0, %v1939
    %v1943 = vsel %vm106, 0.0, %v1938
    %v1944 = vsel %vm107, 0.0, %v1937
    %v1945 = vrot.slane %v1929, 1
    %v1946 = vrot.slane %v1930, 1
    %v1947 = vrot.slane %v1931, 1
    %v1948 = vrot.slane %v1932, 1
    %v1949 = vsel %vm129, %v1947, %v1948
    %v1950 = vsel %vm129, %v1946, %v1947
    %v1951 = vsel %vm129, %v1945, %v1946
    %v1952 = vsel %vm129, %v1948, %v1945
    %v1953 = vsel %vm121, 0.0, %v1951
    %v1954 = vsel %vm122, 0.0, %v1950
    %v1955 = vsel %vm123, 0.0, %v1949
    %v1956 = vsel %vm124, 0.0, %v1952
    %v1957 = vld [vmem:[%s10] sm:$0xff]
    %v1958 = vld [vmem:[%s10 + $0x8] sm:$0xff]
    %v1959 = vld [vmem:[%s10 + $0x10] sm:$0xff]
    %v1960 = vld [vmem:[%s10 + $0x18] sm:$0xff]
    %s1961 = scalar_lea.vmem %s10, 32
    %v1962 = vld [vmem:[%s1961] sm:$0xff]
    %v1963 = vld [vmem:[%s1961 + $0x8] sm:$0xff]
    %v1964 = vld [vmem:[%s1961 + $0x10] sm:$0xff]
    %v1965 = vld [vmem:[%s1961 + $0x18] sm:$0xff]
    %v1967 = vsel %vm497, %v1929, 0
    %v1970 = vsel %vm497, %v1930, 0
    %v1973 = vsel %vm497, %v1931, 0
    %v1976 = vsel %vm497, %v1932, 0
    %1978 = vmatprep.subr.mxu0 0.0
    %1979 = vmatpush1.msra.mxu0 0.0
    %1980 = vmatprep.subr.mxu0 0.0
    %1981 = vmatpush1.msra.mxu0 0.0
    %1982 = vmatprep.subr.mxu0 0.0
    %1983 = vmatpush1.msra.mxu0 0.0
    %1984 = vmatprep.subr.mxu0 0.0
    %1985 = vmatpush1.msra.mxu0 0.0
    %1986 = vmatprep.subr.mxu0 0.0
    %1987 = vmatpush1.msra.mxu0 0.0
    %1988 = vmatprep.subr.mxu0 0.0
    %1989 = vmatpush1.msra.mxu0 0.0
    %1990 = vmatprep.subr.mxu0 0.0
    %1991 = vmatpush1.msra.mxu0 0.0
    %1992 = vmatprep.subr.mxu0 0.0
    %1993 = vmatpush1.msra.mxu0 0.0
    %1994 = vmatprep.subr.mxu0 0.0
    %1995 = vmatpush1.msra.mxu0 0.0
    %1996 = vmatprep.subr.mxu0 0.0
    %1997 = vmatpush1.msra.mxu0 0.0
    %1998 = vmatprep.subr.mxu0 0.0
    %1999 = vmatpush1.msra.mxu0 0.0
    %2000 = vmatprep.subr.mxu0 0.0
    %2001 = vmatpush1.msra.mxu0 0.0
    %2002 = vmatprep.subr.mxu0 0.0
    %2003 = vmatpush1.msra.mxu0 %v1965
    %2004 = vmatprep.subr.mxu0 0.0
    %2005 = vmatpush1.msra.mxu0 %v1964
    %2006 = vmatprep.subr.mxu0 0.0
    %2007 = vmatpush1.msra.mxu0 %v1963
    %2008 = vmatprep.subr.mxu0 0.0
    %2009 = vmatpush1.msra.mxu0 %v1962
    %2010 = vmatprep.subr.mxu0 0.0
    %2011 = vmatpush2.msra.mxu0 0.0
    %2012 = vmatprep.subr.mxu0 0.0
    %2013 = vmatpush2.msra.mxu0 0.0
    %2014 = vmatprep.subr.mxu0 0.0
    %2015 = vmatpush2.msra.mxu0 0.0
    %2016 = vmatprep.subr.mxu0 0.0
    %2017 = vmatpush2.msra.mxu0 0.0
    %2018 = vmatprep.subr.mxu0 0.0
    %2019 = vmatpush2.msra.mxu0 0.0
    %2020 = vmatprep.subr.mxu0 0.0
    %2021 = vmatpush2.msra.mxu0 0.0
    %2022 = vmatprep.subr.mxu0 0.0
    %2023 = vmatpush2.msra.mxu0 0.0
    %2024 = vmatprep.subr.mxu0 0.0
    %2025 = vmatpush2.msra.mxu0 0.0
    %2026 = vmatprep.subr.mxu0 0.0
    %2027 = vmatpush2.msra.mxu0 0.0
    %2028 = vmatprep.subr.mxu0 0.0
    %2029 = vmatpush2.msra.mxu0 0.0
    %2030 = vmatprep.subr.mxu0 0.0
    %2031 = vmatpush2.msra.mxu0 0.0
    %2032 = vmatprep.subr.mxu0 0.0
    %2033 = vmatpush2.msra.mxu0 0.0
    %2034 = vmatprep.subr.mxu0 0.0
    %2035 = vmatpush2.msra.mxu0 0.0
    %2036 = vmatprep.subr.mxu0 0.0
    %2037 = vmatpush2.msra.mxu0 0.0
    %2038 = vmatprep.subr.mxu0 0.0
    %2039 = vmatpush2.msra.mxu0 0.0
    %2040 = vmatprep.subr.mxu0 0.0
    %2041 = vmatpush2.msra.mxu0 0.0
    %2042 = vmatprep.mubr.f32.mxu0 0.0
    %2043 = vmatmul.mubr.f32.gmra.mxu0 %v1967
    %v2044 = vpop.f32.mrf.mxu0
    %v2045 = vadd.f32 0.0, %v2044
    %v2046 = vpop.f32.mrf.mxu0
    %2047 = vmatprep.mubr.f32.mxu0 0.0
    %2048 = vmatmul.mubr.f32.gmra.mxu0 %v1970
    %v2049 = vpop.f32.mrf.mxu0
    %v2050 = vadd.f32 0.0, %v2049
    %v2051 = vpop.f32.mrf.mxu0
    %2052 = vmatprep.mubr.f32.mxu0 0.0
    %2053 = vmatmul.mubr.f32.gmra.mxu0 %v1973
    %v2054 = vpop.f32.mrf.mxu0
    %v2055 = vadd.f32 0.0, %v2054
    %v2056 = vpop.f32.mrf.mxu0
    %2057 = vmatprep.mubr.f32.mxu0 0.0
    %2058 = vmatmul.mubr.f32.gmra.mxu0 %v1976
    %v2059 = vpop.f32.mrf.mxu0
    %v2060 = vadd.f32 0.0, %v2059
    %v2061 = vpop.f32.mrf.mxu0
    %2062 = vdwg.mxu0
    %v2064 = vsel %vm497, %v1941, 0
    %v2067 = vsel %vm497, %v1942, 0
    %v2070 = vsel %vm497, %v1943, 0
    %v2073 = vsel %vm497, %v1944, 0
    %2075 = vmatprep.subr.mxu0 0.0
    %2076 = vmatpush1.msra.mxu0 0.0
    %2077 = vmatprep.subr.mxu0 0.0
    %2078 = vmatpush1.msra.mxu0 0.0
    %2079 = vmatprep.subr.mxu0 0.0
    %2080 = vmatpush1.msra.mxu0 0.0
    %2081 = vmatprep.subr.mxu0 0.0
    %2082 = vmatpush1.msra.mxu0 0.0
    %2083 = vmatprep.subr.mxu0 0.0
    %2084 = vmatpush1.msra.mxu0 0.0
    %2085 = vmatprep.subr.mxu0 0.0
    %2086 = vmatpush1.msra.mxu0 0.0
    %2087 = vmatprep.subr.mxu0 0.0
    %2088 = vmatpush1.msra.mxu0 0.0
    %2089 = vmatprep.subr.mxu0 0.0
    %2090 = vmatpush1.msra.mxu0 0.0
    %2091 = vmatprep.subr.mxu0 0.0
    %2092 = vmatpush1.msra.mxu0 0.0
    %2093 = vmatprep.subr.mxu0 0.0
    %2094 = vmatpush1.msra.mxu0 0.0
    %2095 = vmatprep.subr.mxu0 0.0
    %2096 = vmatpush1.msra.mxu0 0.0
    %2097 = vmatprep.subr.mxu0 0.0
    %2098 = vmatpush1.msra.mxu0 0.0
    %2099 = vmatprep.subr.mxu0 0.0
    %2100 = vmatpush1.msra.mxu0 %v1960
    %2101 = vmatprep.subr.mxu0 0.0
    %2102 = vmatpush1.msra.mxu0 %v1959
    %2103 = vmatprep.subr.mxu0 0.0
    %2104 = vmatpush1.msra.mxu0 %v1958
    %2105 = vmatprep.subr.mxu0 0.0
    %2106 = vmatpush1.msra.mxu0 %v1957
    %2107 = vmatprep.subr.mxu0 0.0
    %2108 = vmatpush2.msra.mxu0 0.0
    %2109 = vmatprep.subr.mxu0 0.0
    %2110 = vmatpush2.msra.mxu0 0.0
    %2111 = vmatprep.subr.mxu0 0.0
    %2112 = vmatpush2.msra.mxu0 0.0
    %2113 = vmatprep.subr.mxu0 0.0
    %2114 = vmatpush2.msra.mxu0 0.0
    %2115 = vmatprep.subr.mxu0 0.0
    %2116 = vmatpush2.msra.mxu0 0.0
    %2117 = vmatprep.subr.mxu0 0.0
    %2118 = vmatpush2.msra.mxu0 0.0
    %2119 = vmatprep.subr.mxu0 0.0
    %2120 = vmatpush2.msra.mxu0 0.0
    %2121 = vmatprep.subr.mxu0 0.0
    %2122 = vmatpush2.msra.mxu0 0.0
    %2123 = vmatprep.subr.mxu0 0.0
    %2124 = vmatpush2.msra.mxu0 0.0
    %2125 = vmatprep.subr.mxu0 0.0
    %2126 = vmatpush2.msra.mxu0 0.0
    %2127 = vmatprep.subr.mxu0 0.0
    %2128 = vmatpush2.msra.mxu0 0.0
    %2129 = vmatprep.subr.mxu0 0.0
    %2130 = vmatpush2.msra.mxu0 0.0
    %2131 = vmatprep.subr.mxu0 0.0
    %2132 = vmatpush2.msra.mxu0 0.0
    %2133 = vmatprep.subr.mxu0 0.0
    %2134 = vmatpush2.msra.mxu0 0.0
    %2135 = vmatprep.subr.mxu0 0.0
    %2136 = vmatpush2.msra.mxu0 0.0
    %2137 = vmatprep.subr.mxu0 0.0
    %2138 = vmatpush2.msra.mxu0 0.0
    %2139 = vmatprep.mubr.f32.mxu0 0.0
    %2140 = vmatmul.mubr.f32.gmra.mxu0 %v2064
    %v2141 = vpop.f32.mrf.mxu0
    %v2142 = vadd.f32 %v2045, %v2141
    %v2143 = vpop.f32.mrf.mxu0
    %2144 = vmatprep.mubr.f32.mxu0 0.0
    %2145 = vmatmul.mubr.f32.gmra.mxu0 %v2067
    %v2146 = vpop.f32.mrf.mxu0
    %v2147 = vadd.f32 %v2050, %v2146
    %v2148 = vpop.f32.mrf.mxu0
    %2149 = vmatprep.mubr.f32.mxu0 0.0
    %2150 = vmatmul.mubr.f32.gmra.mxu0 %v2070
    %v2151 = vpop.f32.mrf.mxu0
    %v2152 = vadd.f32 %v2055, %v2151
    %v2153 = vpop.f32.mrf.mxu0
    %2154 = vmatprep.mubr.f32.mxu0 0.0
    %2155 = vmatmul.mubr.f32.gmra.mxu0 %v2073
    %v2156 = vpop.f32.mrf.mxu0
    %v2157 = vadd.f32 %v2060, %v2156
    %v2158 = vpop.f32.mrf.mxu0
    %2159 = vdwg.mxu0
    %s2160 = scalar_lea.vmem %s10, 64
    %v2161 = vld [vmem:[%s2160] sm:$0xff]
    %v2162 = vld [vmem:[%s2160 + $0x8] sm:$0xff]
    %v2163 = vld [vmem:[%s2160 + $0x10] sm:$0xff]
    %v2164 = vld [vmem:[%s2160 + $0x18] sm:$0xff]
    %v2166 = vsel %vm497, %v1953, 0
    %v2169 = vsel %vm497, %v1954, 0
    %v2172 = vsel %vm497, %v1955, 0
    %v2175 = vsel %vm497, %v1956, 0
    %2177 = vmatprep.subr.mxu0 0.0
    %2178 = vmatpush1.msra.mxu0 0.0
    %2179 = vmatprep.subr.mxu0 0.0
    %2180 = vmatpush1.msra.mxu0 0.0
    %2181 = vmatprep.subr.mxu0 0.0
    %2182 = vmatpush1.msra.mxu0 0.0
    %2183 = vmatprep.subr.mxu0 0.0
    %2184 = vmatpush1.msra.mxu0 0.0
    %2185 = vmatprep.subr.mxu0 0.0
    %2186 = vmatpush1.msra.mxu0 0.0
    %2187 = vmatprep.subr.mxu0 0.0
    %2188 = vmatpush1.msra.mxu0 0.0
    %2189 = vmatprep.subr.mxu0 0.0
    %2190 = vmatpush1.msra.mxu0 0.0
    %2191 = vmatprep.subr.mxu0 0.0
    %2192 = vmatpush1.msra.mxu0 0.0
    %2193 = vmatprep.subr.mxu0 0.0
    %2194 = vmatpush1.msra.mxu0 0.0
    %2195 = vmatprep.subr.mxu0 0.0
    %2196 = vmatpush1.msra.mxu0 0.0
    %2197 = vmatprep.subr.mxu0 0.0
    %2198 = vmatpush1.msra.mxu0 0.0
    %2199 = vmatprep.subr.mxu0 0.0
    %2200 = vmatpush1.msra.mxu0 0.0
    %2201 = vmatprep.subr.mxu0 0.0
    %2202 = vmatpush1.msra.mxu0 %v2164
    %2203 = vmatprep.subr.mxu0 0.0
    %2204 = vmatpush1.msra.mxu0 %v2163
    %2205 = vmatprep.subr.mxu0 0.0
    %2206 = vmatpush1.msra.mxu0 %v2162
    %2207 = vmatprep.subr.mxu0 0.0
    %2208 = vmatpush1.msra.mxu0 %v2161
    %2209 = vmatprep.subr.mxu0 0.0
    %2210 = vmatpush2.msra.mxu0 0.0
    %2211 = vmatprep.subr.mxu0 0.0
    %2212 = vmatpush2.msra.mxu0 0.0
    %2213 = vmatprep.subr.mxu0 0.0
    %2214 = vmatpush2.msra.mxu0 0.0
    %2215 = vmatprep.subr.mxu0 0.0
    %2216 = vmatpush2.msra.mxu0 0.0
    %2217 = vmatprep.subr.mxu0 0.0
    %2218 = vmatpush2.msra.mxu0 0.0
    %2219 = vmatprep.subr.mxu0 0.0
    %2220 = vmatpush2.msra.mxu0 0.0
    %2221 = vmatprep.subr.mxu0 0.0
    %2222 = vmatpush2.msra.mxu0 0.0
    %2223 = vmatprep.subr.mxu0 0.0
    %2224 = vmatpush2.msra.mxu0 0.0
    %2225 = vmatprep.subr.mxu0 0.0
    %2226 = vmatpush2.msra.mxu0 0.0
    %2227 = vmatprep.subr.mxu0 0.0
    %2228 = vmatpush2.msra.mxu0 0.0
    %2229 = vmatprep.subr.mxu0 0.0
    %2230 = vmatpush2.msra.mxu0 0.0
    %2231 = vmatprep.subr.mxu0 0.0
    %2232 = vmatpush2.msra.mxu0 0.0
    %2233 = vmatprep.subr.mxu0 0.0
    %2234 = vmatpush2.msra.mxu0 0.0
    %2235 = vmatprep.subr.mxu0 0.0
    %2236 = vmatpush2.msra.mxu0 0.0
    %2237 = vmatprep.subr.mxu0 0.0
    %2238 = vmatpush2.msra.mxu0 0.0
    %2239 = vmatprep.subr.mxu0 0.0
    %2240 = vmatpush2.msra.mxu0 0.0
    %2241 = vmatprep.mubr.f32.mxu0 0.0
    %2242 = vmatmul.mubr.f32.gmra.mxu0 %v2166
    %v2243 = vpop.f32.mrf.mxu0
    %v2244 = vadd.f32 0.0, %v2243
    %v2245 = vpop.f32.mrf.mxu0
    %2246 = vmatprep.mubr.f32.mxu0 0.0
    %2247 = vmatmul.mubr.f32.gmra.mxu0 %v2169
    %v2248 = vpop.f32.mrf.mxu0
    %v2249 = vadd.f32 0.0, %v2248
    %v2250 = vpop.f32.mrf.mxu0
    %2251 = vmatprep.mubr.f32.mxu0 0.0
    %2252 = vmatmul.mubr.f32.gmra.mxu0 %v2172
    %v2253 = vpop.f32.mrf.mxu0
    %v2254 = vadd.f32 0.0, %v2253
    %v2255 = vpop.f32.mrf.mxu0
    %2256 = vmatprep.mubr.f32.mxu0 0.0
    %2257 = vmatmul.mubr.f32.gmra.mxu0 %v2175
    %v2258 = vpop.f32.mrf.mxu0
    %v2259 = vadd.f32 0.0, %v2258
    %v2260 = vpop.f32.mrf.mxu0
    %2261 = vdwg.mxu0
    %v2262 = vadd.f32 %v2142, %v2244
    %v2263 = vadd.f32 %v2147, %v2249
    %v2264 = vadd.f32 %v2152, %v2254
    %v2265 = vadd.f32 %v2157, %v2259
    %v2266 = vld [vmem:[%s11] sm:$0x1]
    %v2268 = vlaneseq
    %v2269 = vshrl.u32 %v2268, 7
    %v2270 = vsub.s32 0, %v2269
    %v2271 = vrot.slane %v2266, %v2270
    %v2273 = vadd.f32 %v2262, %v2271
    %v2274 = vadd.f32 %v2263, %v2271
    %v2275 = vadd.f32 %v2264, %v2271
    %v2276 = vadd.f32 %v2265, %v2271
    %2277 = vst.msk [vmem:[%s12] sm:$0xff] %vm141, %v2273
    %2278 = vst.msk [vmem:[%s12 + $0x8] sm:$0xff] %vm141, %v2274
    %2279 = vst.msk [vmem:[%s12 + $0x10] sm:$0xff] %vm141, %v2275
    %2280 = vst.msk [vmem:[%s12 + $0x18] sm:$0xff] %vm141, %v2276
    // Predicated region
    $region50: #{audio_vqvae_forward.1} parent=1 // pred_check
      _
    $region51: #{audio_vqvae_forward.1} parent=1 // pred_check_branch
      %2282 = sbr.rel (0) target = $region53
    $region52: #{audio_vqvae_forward.1} parent=1 // pred_region
      _
    $region53: #{audio_vqvae_forward.1} parent=1 // pred_fallthru
      _
    // Predicated region
    $region54: #{audio_vqvae_forward.1} parent=1 // pred_check
      _
    $region55: #{audio_vqvae_forward.1} parent=1 // pred_check_branch
      %2284 = sbr.rel (0) target = $region57
    $region56: #{audio_vqvae_forward.1} parent=1 // pred_region
      _
    $region57: #{audio_vqvae_forward.1} parent=1 // pred_fallthru
      _
    // Predicated region
    $region58: #{audio_vqvae_forward.1} parent=1 // pred_check
      _
    $region59: #{audio_vqvae_forward.1} parent=1 // pred_check_branch
      %2286 = sbr.rel (0) target = $region61
    $region60: #{audio_vqvae_forward.1} parent=1 // pred_region
      _
    $region61: #{audio_vqvae_forward.1} parent=1 // pred_fallthru
      _
    // Predicated region
    $region62: #{audio_vqvae_forward.1} parent=1 // pred_check
      _
    $region63: #{audio_vqvae_forward.1} parent=1 // pred_check_branch
      %2288 = sbr.rel (0) target = $region65
    $region64: #{audio_vqvae_forward.1} parent=1 // pred_region
      _
    $region65: #{audio_vqvae_forward.1} parent=1 // pred_fallthru
      _
    // Predicated region
    $region66: #{audio_vqvae_forward.1} parent=1 // pred_check
      _
    $region67: #{audio_vqvae_forward.1} parent=1 // pred_check_branch
      %2290 = sbr.rel (0) target = $region69
    $region68: #{audio_vqvae_forward.1} parent=1 // pred_region
      %s2292 = ssub.s32 16, 16
      %2293 = vsyncadd [#allocation3], %s2292
      %s2295 = sshll.u32 [#allocation2], 4
      %s2296 = int_to_ptr.vmem [resolvable:$true] %s2295
      %2298 = dma.vmem_to_hbm [thread:$0]  %s2296, 16, %s16, [#allocation3]
    $region69: #{audio_vqvae_forward.1} parent=1 // pred_fallthru
      _
    // Predicated region
    $region70: #{audio_vqvae_forward.1} parent=1 // pred_check
      _
    $region71: #{audio_vqvae_forward.1} parent=1 // pred_check_branch
      %2300 = sbr.rel (0) target = $region73
    $region72: #{audio_vqvae_forward.1} parent=1 // pred_region
      _
    $region73: #{audio_vqvae_forward.1} parent=1 // pred_fallthru
      _
    // Predicated region
    $region74: #{audio_vqvae_forward.1} parent=1 // pred_check
      _
    $region75: #{audio_vqvae_forward.1} parent=1 // pred_check_branch
      %2302 = sbr.rel (0) target = $region77
    $region76: #{audio_vqvae_forward.1} parent=1 // pred_region
      _
    $region77: #{audio_vqvae_forward.1} parent=1 // pred_fallthru
      _
    // Predicated region
    $region78: #{audio_vqvae_forward.1} parent=1 // pred_check
      _
    $region79: #{audio_vqvae_forward.1} parent=1 // pred_check_branch
      %2304 = sbr.rel (0) target = $region81
    $region80: #{audio_vqvae_forward.1} parent=1 // pred_region
      _
    $region81: #{audio_vqvae_forward.1} parent=1 // pred_fallthru
      _
    // Predicated region
    $region82: #{audio_vqvae_forward.1} parent=1 // pred_check
      _
    $region83: #{audio_vqvae_forward.1} parent=1 // pred_check_branch
      %2306 = sbr.rel (0) target = $region85
    $region84: #{audio_vqvae_forward.1} parent=1 // pred_region
      _
    $region85: #{audio_vqvae_forward.1} parent=1 // pred_fallthru
      _
    // Predicated region
    $region86: #{audio_vqvae_forward.1} parent=1 // pred_check
      _
    $region87: #{audio_vqvae_forward.1} parent=1 // pred_check_branch
      %2308 = sbr.rel (0) target = $region89
    $region88: #{audio_vqvae_forward.1} parent=1 // pred_region
      %2309 = dma.done [#allocation3], 16
    $region89: #{audio_vqvae_forward.1} parent=1 // pred_fallthru
      _
    %2310 = vsyncpa [#allocation3], 1

</llo_original>
